<compile_context>
chip_gen: v7x
topology: tpu7x:2x2x1
jax: 0.10.0
libtpu: 0.0.40
codegen_flags: <defaults>
</compile_context>

<pallas_src>
import functools

import jax
import jax.numpy as jnp
import numpy as np
from jax.experimental import pallas as pl
from jax.experimental.pallas import tpu as pltpu


# ---------------------------------------------------------------------------
# Fused Pallas kernel
# ---------------------------------------------------------------------------

def _fused_kernel(nb, x_ref, w1_ref, b1_ref, w2_ref, b2_ref,
                  wf1_ref, bf1_ref, wf2_ref, bf2_ref, wf3_ref, bf3_ref,
                  out_ref):
    f32 = jnp.float32
    bf16 = jnp.bfloat16
    half = 14 * nb            # rows per input-row-parity block of x_ref
    r1 = 12 * nb              # conv1 output rows per vertical-pool parity (y, n)
    r2 = 8 * nb               # conv2 output rows (y_out, n)

    # ---- conv1: 2 (pool-parity) x 5 (ky) Toeplitz matmuls -------------------
    # x_ref rows are ordered (Y%2, Y//2, n); lanes = input column X (28 of 128).
    # Output lanes: [x*6+c] for even output columns X_out=2x, [128+x*6+c] for
    # odd ones, so the 1x2 horizontal pool is a max of the two 128-lane halves.
    bias1 = jnp.broadcast_to(b1_ref[...], (r1, 256))
    h_ev = bias1              # rows Y_out = 2y   (vertical pool partner 0)
    h_od = bias1              # rows Y_out = 2y+1 (vertical pool partner 1)
    for ky in range(5):
        w1k = w1_ref[ky]                                     # (128, 256) bf16
        s0 = (ky % 2) * half + (ky // 2) * nb                # rows Y = 2y + ky
        h_ev = h_ev + jnp.dot(x_ref[s0:s0 + r1, :], w1k,
                              preferred_element_type=f32)
        s1 = ((ky + 1) % 2) * half + ((ky + 1) // 2) * nb    # Y = 2y + 1 + ky
        h_od = h_od + jnp.dot(x_ref[s1:s1 + r1, :], w1k,
                              preferred_element_type=f32)
    hv = jnp.maximum(h_ev, h_od)                             # 2x1 vertical pool
    p1 = jnp.maximum(hv[:, :128], hv[:, 128:])               # 1x2 horizontal pool
    p1 = jnp.maximum(p1, 0.0).astype(bf16)                   # ReLU; rows (y, n),
                                                             # lanes x*6 + c

    # ---- conv2: 5 Toeplitz matmuls, register accumulator --------------------
    # Output lanes: [px*16+co] for even x_out=2px, [128+px*16+co] for odd.
    h2 = jnp.broadcast_to(b2_ref[...], (r2, 256))
    for ky in range(5):
        h2 = h2 + jnp.dot(p1[ky * nb:ky * nb + r2, :], w2_ref[ky],
                          preferred_element_type=f32)
    h2 = jnp.maximum(h2, 0.0)                                # ReLU
    h2 = jnp.maximum(h2[:, :128], h2[:, 128:])               # 1x2 horizontal pool

    # ---- pool2 vertical + fc1 (NCHW flatten folded into wf1) ----------------
    y = jnp.broadcast_to(bf1_ref[...], (nb, 128))
    for py in range(4):
        blk = jnp.maximum(h2[(2 * py) * nb:(2 * py + 1) * nb, :],
                          h2[(2 * py + 1) * nb:(2 * py + 2) * nb, :])
        y = y + jnp.dot(blk.astype(bf16), wf1_ref[py],
                        preferred_element_type=f32)
    y = jnp.maximum(y, 0.0).astype(bf16)

    # ---- fc2 -> fc3 ----------------------------------------------------------
    y = jnp.dot(y, wf2_ref[...], preferred_element_type=f32) + bf2_ref[...]
    y = jnp.maximum(y, 0.0).astype(bf16)
    y = jnp.dot(y, wf3_ref[...], preferred_element_type=f32) + bf3_ref[...]
    out_ref[...] = y


# ---------------------------------------------------------------------------
# Weight packing (host side, done once)
# ---------------------------------------------------------------------------

def pack_params(params):
    """Pack PyTorch-layout params into dense Toeplitz / lane-packed operands."""
    cw1 = np.asarray(params["conv1_w"], np.float32)   # (6, 1, 5, 5)
    cb1 = np.asarray(params["conv1_b"], np.float32)
    cw2 = np.asarray(params["conv2_w"], np.float32)   # (16, 6, 5, 5)
    cb2 = np.asarray(params["conv2_b"], np.float32)
    fw1 = np.asarray(params["fc1_w"], np.float32)     # (120, 256)
    fb1 = np.asarray(params["fc1_b"], np.float32)
    fw2 = np.asarray(params["fc2_w"], np.float32)     # (84, 120)
    fb2 = np.asarray(params["fc2_b"], np.float32)
    fw3 = np.asarray(params["fc3_w"], np.float32)     # (10, 84)
    fb3 = np.asarray(params["fc3_b"], np.float32)

    # conv1 Toeplitz weights: rows = input column X_in, cols = (x_out, c) with
    # even X_out in lanes [x*6+c] and odd X_out in lanes [128 + x*6+c].
    w1 = np.zeros((5, 128, 256), np.float32)
    b1 = np.zeros((1, 256), np.float32)
    for ky in range(5):
        for x in range(12):
            for c in range(6):
                for kx in range(5):
                    w1[ky, 2 * x + kx, x * 6 + c] = cw1[c, 0, ky, kx]
                    w1[ky, 2 * x + 1 + kx, 128 + x * 6 + c] = cw1[c, 0, ky, kx]
    for x in range(12):
        for c in range(6):
            b1[0, x * 6 + c] = cb1[c]
            b1[0, 128 + x * 6 + c] = cb1[c]

    # conv2 Toeplitz weights: rows = pool1 lane (x_in*6 + ci), cols = (px, co)
    # with even x_out in lanes [px*16+co] and odd x_out in lanes [128+px*16+co].
    w2 = np.zeros((5, 128, 256), np.float32)
    b2 = np.zeros((1, 256), np.float32)
    for ky in range(5):
        for px in range(4):
            for co in range(16):
                for ci in range(6):
                    for kx in range(5):
                        w2[ky, (2 * px + kx) * 6 + ci,
                           px * 16 + co] = cw2[co, ci, ky, kx]
                        w2[ky, (2 * px + 1 + kx) * 6 + ci,
                           128 + px * 16 + co] = cw2[co, ci, ky, kx]
    for px in range(4):
        for co in range(16):
            b2[0, px * 16 + co] = cb2[co]
            b2[0, 128 + px * 16 + co] = cb2[co]

    # fc1: per-py weight, rows = pool2 lane (px*16+co), PyTorch NCHW flatten
    # index j = co*16 + py*4 + px folded in.  Rows 64..127 stay zero (they hold
    # horizontal-pool leftovers in the activation).
    wf1 = np.zeros((4, 128, 128), np.float32)
    bf1 = np.zeros((1, 128), np.float32)
    for py in range(4):
        for px in range(4):
            for co in range(16):
                wf1[py, px * 16 + co, :120] = fw1[:, co * 16 + py * 4 + px]
    bf1[0, :120] = fb1

    wf2 = np.zeros((128, 128), np.float32)
    wf2[:120, :84] = fw2.T
    bf2 = np.zeros((1, 128), np.float32)
    bf2[0, :84] = fb2

    wf3 = np.zeros((128, 128), np.float32)
    wf3[:84, :10] = fw3.T
    bf3 = np.zeros((1, 128), np.float32)
    bf3[0, :10] = fb3

    bf = jnp.bfloat16
    f32 = jnp.float32
    return dict(
        w1=jnp.asarray(w1, bf), b1=jnp.asarray(b1, f32),
        w2=jnp.asarray(w2, bf), b2=jnp.asarray(b2, f32),
        wf1=jnp.asarray(wf1, bf), bf1=jnp.asarray(bf1, f32),
        wf2=jnp.asarray(wf2, bf), bf2=jnp.asarray(bf2, f32),
        wf3=jnp.asarray(wf3, bf), bf3=jnp.asarray(bf3, f32),
    )


# ---------------------------------------------------------------------------
# Forward wrapper
# ---------------------------------------------------------------------------

@jax.jit
def garment_classifier_forward(x_nchw, packed):
    """Fused Pallas forward.  x: (N, 1, 28, 28) float32 -> (N, 10) float32."""
    N = x_nchw.shape[0]

    # Stage the raw input as rows (Y%2, Y//2, n) x lanes (X, padded to 128) so
    # every conv1 tap reads one contiguous 12N-row slice (im2col lives in the
    # Toeplitz weights, not in HBM).
    x = x_nchw[:, 0].astype(jnp.float32)                 # (N, 28, 28)
    x = jnp.transpose(x, (1, 0, 2))                      # (Y, N, X)
    x = x.reshape(14, 2, N, 28).transpose(1, 0, 2, 3)    # (Y%2, Y//2, N, X)
    x = x.reshape(28 * N, 28)
    x = jnp.pad(x, ((0, 0), (0, 100))).astype(jnp.bfloat16)   # (28N, 128)

    vmem = pl.BlockSpec(memory_space=pltpu.MemorySpace.VMEM)
    out = pl.pallas_call(
        functools.partial(_fused_kernel, N),
        out_shape=jax.ShapeDtypeStruct((N, 128), jnp.float32),
        in_specs=[vmem] * 11,
        out_specs=vmem,
    )(x, packed["w1"], packed["b1"], packed["w2"], packed["b2"],
      packed["wf1"], packed["bf1"], packed["wf2"], packed["bf2"],
      packed["wf3"], packed["bf3"])
    return out[:, :10]


# ---------------------------------------------------------------------------
# Parameter init + pure-JAX f32 reference (for verification)
# ---------------------------------------------------------------------------

def init_params(key):
    """Deterministic synthetic parameters with PyTorch layouts/shapes."""
    ks = jax.random.split(key, 10)

    def u(k, shape, fan_in):
        bound = 1.0 / np.sqrt(fan_in)
        return jax.random.uniform(k, shape, jnp.float32, -bound, bound)

    return {
        "conv1_w": u(ks[0], (6, 1, 5, 5), 1 * 5 * 5),
        "conv1_b": u(ks[1], (6,), 1 * 5 * 5),
        "conv2_w": u(ks[2], (16, 6, 5, 5), 6 * 5 * 5),
        "conv2_b": u(ks[3], (16,), 6 * 5 * 5),
        "fc1_w": u(ks[4], (120, 256), 256),
        "fc1_b": u(ks[5], (120,), 256),
        "fc2_w": u(ks[6], (84, 120), 120),
        "fc2_b": u(ks[7], (84,), 120),
        "fc3_w": u(ks[8], (10, 84), 84),
        "fc3_b": u(ks[9], (10,), 84),
    }


def reference_forward(x_nchw, params):
    """Pure-JAX f32 reference matching the PyTorch forward."""
    def conv(x, w, b):
        y = jax.lax.conv_general_dilated(
            x, w, window_strides=(1, 1), padding="VALID",
            dimension_numbers=("NCHW", "OIHW", "NCHW"))
        return y + b[None, :, None, None]

    def pool(x):
        return jax.lax.reduce_window(x, -jnp.inf, jax.lax.max,
                                     (1, 1, 2, 2), (1, 1, 2, 2), "VALID")

    h = pool(jax.nn.relu(conv(x_nchw, params["conv1_w"], params["conv1_b"])))
    h = pool(jax.nn.relu(conv(h, params["conv2_w"], params["conv2_b"])))
    h = h.reshape(h.shape[0], -1)
    h = jax.nn.relu(h @ params["fc1_w"].T + params["fc1_b"])
    h = jax.nn.relu(h @ params["fc2_w"].T + params["fc2_b"])
    return h @ params["fc3_w"].T + params["fc3_b"]


if __name__ == "__main__":
    key = jax.random.PRNGKey(0)
    k_x, k_p = jax.random.split(key)

    # FashionMNIST-shaped input (batch=2, 1 channel, 28x28), as required by the
    # 16*4*4 flatten in the module.
    x = jax.random.normal(k_x, (2, 1, 28, 28), dtype=jnp.float32)
    params = init_params(k_p)
    packed = pack_params(params)          # hoisted, done once

    out = jax.block_until_ready(garment_classifier_forward(x, packed))
    assert out.shape == (2, 10), out.shape

    ref = jax.block_until_ready(reference_forward(x, params))
    # bf16 MXU operands (f32 accumulation) -> relaxed tolerance vs f32 reference.
    np.testing.assert_allclose(np.asarray(out), np.asarray(ref),
                               rtol=2e-2, atol=2e-2)

    print("KERNEL_OK")
</pallas_src>

<mosaic_0001>
module attributes {stable_mosaic.version = 11 : i64} {
  func.func @_fused_kernel(%arg0: memref<56x128xbf16, #tpu.memory_space<vmem>>, %arg1: memref<5x128x256xbf16, #tpu.memory_space<vmem>>, %arg2: memref<1x256xf32, #tpu.memory_space<vmem>>, %arg3: memref<5x128x256xbf16, #tpu.memory_space<vmem>>, %arg4: memref<1x256xf32, #tpu.memory_space<vmem>>, %arg5: memref<4x128x128xbf16, #tpu.memory_space<vmem>>, %arg6: memref<1x128xf32, #tpu.memory_space<vmem>>, %arg7: memref<128x128xbf16, #tpu.memory_space<vmem>>, %arg8: memref<1x128xf32, #tpu.memory_space<vmem>>, %arg9: memref<128x128xbf16, #tpu.memory_space<vmem>>, %arg10: memref<1x128xf32, #tpu.memory_space<vmem>>, %arg11: memref<2x128xf32, #tpu.memory_space<vmem>>) attributes {dimension_semantics = [], scalar_prefetch = 0 : i64, scratch_operands = 0 : i64, tpu.core_type = #tpu.core_type<tc>} {
    %c0 = arith.constant 0 : index
    %c0_0 = arith.constant 0 : index
    %0 = vector.load %arg2[%c0, %c0_0] : memref<1x256xf32, #tpu.memory_space<vmem>>, vector<1x256xf32>
    %1 = vector.shape_cast %0 : vector<1x256xf32> to vector<1x256xf32>
    %2 = vector.broadcast %1 : vector<1x256xf32> to vector<24x256xf32>
    %c0_1 = arith.constant 0 : index
    %c0_2 = arith.constant 0 : index
    %c0_3 = arith.constant 0 : index
    %3 = vector.load %arg1[%c0_1, %c0_2, %c0_3] : memref<5x128x256xbf16, #tpu.memory_space<vmem>>, vector<1x128x256xbf16>
    %4 = vector.shape_cast %3 : vector<1x128x256xbf16> to vector<128x256xbf16>
    %c0_4 = arith.constant 0 : index
    %c0_5 = arith.constant 0 : index
    %5 = vector.load %arg0[%c0_4, %c0_5] : memref<56x128xbf16, #tpu.memory_space<vmem>>, vector<24x128xbf16>
    %cst = arith.constant dense<0.000000e+00> : vector<24x256xf32>
    %6 = tpu.matmul %5, %4, %cst {dimension_numbers = #tpu.dot_dimension_numbers<[1], [0], [0], [1], [0, 0, 1, 1], [], []>} : vector<24x128xbf16>, vector<128x256xbf16>, vector<24x256xf32> -> vector<24x256xf32>
    %7 = arith.addf %2, %6 : vector<24x256xf32>
    %c28 = arith.constant 28 : index
    %c0_6 = arith.constant 0 : index
    %8 = vector.load %arg0[%c28, %c0_6] : memref<56x128xbf16, #tpu.memory_space<vmem>>, vector<24x128xbf16>
    %cst_7 = arith.constant dense<0.000000e+00> : vector<24x256xf32>
    %9 = tpu.matmul %8, %4, %cst_7 {dimension_numbers = #tpu.dot_dimension_numbers<[1], [0], [0], [1], [0, 0, 1, 1], [], []>} : vector<24x128xbf16>, vector<128x256xbf16>, vector<24x256xf32> -> vector<24x256xf32>
    %10 = arith.addf %2, %9 : vector<24x256xf32>
    %c1 = arith.constant 1 : index
    %c0_8 = arith.constant 0 : index
    %c0_9 = arith.constant 0 : index
    %11 = vector.load %arg1[%c1, %c0_8, %c0_9] : memref<5x128x256xbf16, #tpu.memory_space<vmem>>, vector<1x128x256xbf16>
    %12 = vector.shape_cast %11 : vector<1x128x256xbf16> to vector<128x256xbf16>
    %c28_10 = arith.constant 28 : index
    %c0_11 = arith.constant 0 : index
    %13 = vector.load %arg0[%c28_10, %c0_11] : memref<56x128xbf16, #tpu.memory_space<vmem>>, vector<24x128xbf16>
    %cst_12 = arith.constant dense<0.000000e+00> : vector<24x256xf32>
    %14 = tpu.matmul %13, %12, %cst_12 {dimension_numbers = #tpu.dot_dimension_numbers<[1], [0], [0], [1], [0, 0, 1, 1], [], []>} : vector<24x128xbf16>, vector<128x256xbf16>, vector<24x256xf32> -> vector<24x256xf32>
    %15 = arith.addf %7, %14 : vector<24x256xf32>
    %c2 = arith.constant 2 : index
    %c0_13 = arith.constant 0 : index
    %16 = vector.load %arg0[%c2, %c0_13] : memref<56x128xbf16, #tpu.memory_space<vmem>>, vector<24x128xbf16>
    %cst_14 = arith.constant dense<0.000000e+00> : vector<24x256xf32>
    %17 = tpu.matmul %16, %12, %cst_14 {dimension_numbers = #tpu.dot_dimension_numbers<[1], [0], [0], [1], [0, 0, 1, 1], [], []>} : vector<24x128xbf16>, vector<128x256xbf16>, vector<24x256xf32> -> vector<24x256xf32>
    %18 = arith.addf %10, %17 : vector<24x256xf32>
    %c2_15 = arith.constant 2 : index
    %c0_16 = arith.constant 0 : index
    %c0_17 = arith.constant 0 : index
    %19 = vector.load %arg1[%c2_15, %c0_16, %c0_17] : memref<5x128x256xbf16, #tpu.memory_space<vmem>>, vector<1x128x256xbf16>
    %20 = vector.shape_cast %19 : vector<1x128x256xbf16> to vector<128x256xbf16>
    %c2_18 = arith.constant 2 : index
    %c0_19 = arith.constant 0 : index
    %21 = vector.load %arg0[%c2_18, %c0_19] : memref<56x128xbf16, #tpu.memory_space<vmem>>, vector<24x128xbf16>
    %cst_20 = arith.constant dense<0.000000e+00> : vector<24x256xf32>
    %22 = tpu.matmul %21, %20, %cst_20 {dimension_numbers = #tpu.dot_dimension_numbers<[1], [0], [0], [1], [0, 0, 1, 1], [], []>} : vector<24x128xbf16>, vector<128x256xbf16>, vector<24x256xf32> -> vector<24x256xf32>
    %23 = arith.addf %15, %22 : vector<24x256xf32>
    %c30 = arith.constant 30 : index
    %c0_21 = arith.constant 0 : index
    %24 = vector.load %arg0[%c30, %c0_21] : memref<56x128xbf16, #tpu.memory_space<vmem>>, vector<24x128xbf16>
    %cst_22 = arith.constant dense<0.000000e+00> : vector<24x256xf32>
    %25 = tpu.matmul %24, %20, %cst_22 {dimension_numbers = #tpu.dot_dimension_numbers<[1], [0], [0], [1], [0, 0, 1, 1], [], []>} : vector<24x128xbf16>, vector<128x256xbf16>, vector<24x256xf32> -> vector<24x256xf32>
    %26 = arith.addf %18, %25 : vector<24x256xf32>
    %c3 = arith.constant 3 : index
    %c0_23 = arith.constant 0 : index
    %c0_24 = arith.constant 0 : index
    %27 = vector.load %arg1[%c3, %c0_23, %c0_24] : memref<5x128x256xbf16, #tpu.memory_space<vmem>>, vector<1x128x256xbf16>
    %28 = vector.shape_cast %27 : vector<1x128x256xbf16> to vector<128x256xbf16>
    %c30_25 = arith.constant 30 : index
    %c0_26 = arith.constant 0 : index
    %29 = vector.load %arg0[%c30_25, %c0_26] : memref<56x128xbf16, #tpu.memory_space<vmem>>, vector<24x128xbf16>
    %cst_27 = arith.constant dense<0.000000e+00> : vector<24x256xf32>
    %30 = tpu.matmul %29, %28, %cst_27 {dimension_numbers = #tpu.dot_dimension_numbers<[1], [0], [0], [1], [0, 0, 1, 1], [], []>} : vector<24x128xbf16>, vector<128x256xbf16>, vector<24x256xf32> -> vector<24x256xf32>
    %31 = arith.addf %23, %30 : vector<24x256xf32>
    %c4 = arith.constant 4 : index
    %c0_28 = arith.constant 0 : index
    %32 = vector.load %arg0[%c4, %c0_28] : memref<56x128xbf16, #tpu.memory_space<vmem>>, vector<24x128xbf16>
    %cst_29 = arith.constant dense<0.000000e+00> : vector<24x256xf32>
    %33 = tpu.matmul %32, %28, %cst_29 {dimension_numbers = #tpu.dot_dimension_numbers<[1], [0], [0], [1], [0, 0, 1, 1], [], []>} : vector<24x128xbf16>, vector<128x256xbf16>, vector<24x256xf32> -> vector<24x256xf32>
    %34 = arith.addf %26, %33 : vector<24x256xf32>
    %c4_30 = arith.constant 4 : index
    %c0_31 = arith.constant 0 : index
    %c0_32 = arith.constant 0 : index
    %35 = vector.load %arg1[%c4_30, %c0_31, %c0_32] : memref<5x128x256xbf16, #tpu.memory_space<vmem>>, vector<1x128x256xbf16>
    %36 = vector.shape_cast %35 : vector<1x128x256xbf16> to vector<128x256xbf16>
    %c4_33 = arith.constant 4 : index
    %c0_34 = arith.constant 0 : index
    %37 = vector.load %arg0[%c4_33, %c0_34] : memref<56x128xbf16, #tpu.memory_space<vmem>>, vector<24x128xbf16>
    %cst_35 = arith.constant dense<0.000000e+00> : vector<24x256xf32>
    %38 = tpu.matmul %37, %36, %cst_35 {dimension_numbers = #tpu.dot_dimension_numbers<[1], [0], [0], [1], [0, 0, 1, 1], [], []>} : vector<24x128xbf16>, vector<128x256xbf16>, vector<24x256xf32> -> vector<24x256xf32>
    %39 = arith.addf %31, %38 : vector<24x256xf32>
    %c32 = arith.constant 32 : index
    %c0_36 = arith.constant 0 : index
    %40 = vector.load %arg0[%c32, %c0_36] : memref<56x128xbf16, #tpu.memory_space<vmem>>, vector<24x128xbf16>
    %cst_37 = arith.constant dense<0.000000e+00> : vector<24x256xf32>
    %41 = tpu.matmul %40, %36, %cst_37 {dimension_numbers = #tpu.dot_dimension_numbers<[1], [0], [0], [1], [0, 0, 1, 1], [], []>} : vector<24x128xbf16>, vector<128x256xbf16>, vector<24x256xf32> -> vector<24x256xf32>
    %42 = arith.addf %34, %41 : vector<24x256xf32>
    %43 = arith.maximumf %39, %42 : vector<24x256xf32>
    %44 = vector.extract_strided_slice %43 {offsets = [0, 0], sizes = [24, 128], strides = [1, 1]} : vector<24x256xf32> to vector<24x128xf32>
    %45 = vector.extract_strided_slice %43 {offsets = [0, 128], sizes = [24, 128], strides = [1, 1]} : vector<24x256xf32> to vector<24x128xf32>
    %46 = arith.maximumf %44, %45 : vector<24x128xf32>
    %cst_38 = arith.constant 0.000000e+00 : f32
    %47 = vector.broadcast %cst_38 : f32 to vector<24x128xf32>
    %48 = arith.maximumf %46, %47 : vector<24x128xf32>
    %49 = arith.truncf %48 : vector<24x128xf32> to vector<24x128xbf16>
    %c0_39 = arith.constant 0 : index
    %c0_40 = arith.constant 0 : index
    %50 = vector.load %arg4[%c0_39, %c0_40] : memref<1x256xf32, #tpu.memory_space<vmem>>, vector<1x256xf32>
    %51 = vector.shape_cast %50 : vector<1x256xf32> to vector<1x256xf32>
    %52 = vector.broadcast %51 : vector<1x256xf32> to vector<16x256xf32>
    %53 = vector.extract_strided_slice %49 {offsets = [0, 0], sizes = [16, 128], strides = [1, 1]} : vector<24x128xbf16> to vector<16x128xbf16>
    %c0_41 = arith.constant 0 : index
    %c0_42 = arith.constant 0 : index
    %c0_43 = arith.constant 0 : index
    %54 = vector.load %arg3[%c0_41, %c0_42, %c0_43] : memref<5x128x256xbf16, #tpu.memory_space<vmem>>, vector<1x128x256xbf16>
    %55 = vector.shape_cast %54 : vector<1x128x256xbf16> to vector<128x256xbf16>
    %cst_44 = arith.constant dense<0.000000e+00> : vector<16x256xf32>
    %56 = tpu.matmul %53, %55, %cst_44 {dimension_numbers = #tpu.dot_dimension_numbers<[1], [0], [0], [1], [0, 0, 1, 1], [], []>} : vector<16x128xbf16>, vector<128x256xbf16>, vector<16x256xf32> -> vector<16x256xf32>
    %57 = arith.addf %52, %56 : vector<16x256xf32>
    %58 = vector.extract_strided_slice %49 {offsets = [2, 0], sizes = [16, 128], strides = [1, 1]} : vector<24x128xbf16> to vector<16x128xbf16>
    %c1_45 = arith.constant 1 : index
    %c0_46 = arith.constant 0 : index
    %c0_47 = arith.constant 0 : index
    %59 = vector.load %arg3[%c1_45, %c0_46, %c0_47] : memref<5x128x256xbf16, #tpu.memory_space<vmem>>, vector<1x128x256xbf16>
    %60 = vector.shape_cast %59 : vector<1x128x256xbf16> to vector<128x256xbf16>
    %cst_48 = arith.constant dense<0.000000e+00> : vector<16x256xf32>
    %61 = tpu.matmul %58, %60, %cst_48 {dimension_numbers = #tpu.dot_dimension_numbers<[1], [0], [0], [1], [0, 0, 1, 1], [], []>} : vector<16x128xbf16>, vector<128x256xbf16>, vector<16x256xf32> -> vector<16x256xf32>
    %62 = arith.addf %57, %61 : vector<16x256xf32>
    %63 = vector.extract_strided_slice %49 {offsets = [4, 0], sizes = [16, 128], strides = [1, 1]} : vector<24x128xbf16> to vector<16x128xbf16>
    %c2_49 = arith.constant 2 : index
    %c0_50 = arith.constant 0 : index
    %c0_51 = arith.constant 0 : index
    %64 = vector.load %arg3[%c2_49, %c0_50, %c0_51] : memref<5x128x256xbf16, #tpu.memory_space<vmem>>, vector<1x128x256xbf16>
    %65 = vector.shape_cast %64 : vector<1x128x256xbf16> to vector<128x256xbf16>
    %cst_52 = arith.constant dense<0.000000e+00> : vector<16x256xf32>
    %66 = tpu.matmul %63, %65, %cst_52 {dimension_numbers = #tpu.dot_dimension_numbers<[1], [0], [0], [1], [0, 0, 1, 1], [], []>} : vector<16x128xbf16>, vector<128x256xbf16>, vector<16x256xf32> -> vector<16x256xf32>
    %67 = arith.addf %62, %66 : vector<16x256xf32>
    %68 = vector.extract_strided_slice %49 {offsets = [6, 0], sizes = [16, 128], strides = [1, 1]} : vector<24x128xbf16> to vector<16x128xbf16>
    %c3_53 = arith.constant 3 : index
    %c0_54 = arith.constant 0 : index
    %c0_55 = arith.constant 0 : index
    %69 = vector.load %arg3[%c3_53, %c0_54, %c0_55] : memref<5x128x256xbf16, #tpu.memory_space<vmem>>, vector<1x128x256xbf16>
    %70 = vector.shape_cast %69 : vector<1x128x256xbf16> to vector<128x256xbf16>
    %cst_56 = arith.constant dense<0.000000e+00> : vector<16x256xf32>
    %71 = tpu.matmul %68, %70, %cst_56 {dimension_numbers = #tpu.dot_dimension_numbers<[1], [0], [0], [1], [0, 0, 1, 1], [], []>} : vector<16x128xbf16>, vector<128x256xbf16>, vector<16x256xf32> -> vector<16x256xf32>
    %72 = arith.addf %67, %71 : vector<16x256xf32>
    %73 = vector.extract_strided_slice %49 {offsets = [8, 0], sizes = [16, 128], strides = [1, 1]} : vector<24x128xbf16> to vector<16x128xbf16>
    %c4_57 = arith.constant 4 : index
    %c0_58 = arith.constant 0 : index
    %c0_59 = arith.constant 0 : index
    %74 = vector.load %arg3[%c4_57, %c0_58, %c0_59] : memref<5x128x256xbf16, #tpu.memory_space<vmem>>, vector<1x128x256xbf16>
    %75 = vector.shape_cast %74 : vector<1x128x256xbf16> to vector<128x256xbf16>
    %cst_60 = arith.constant dense<0.000000e+00> : vector<16x256xf32>
    %76 = tpu.matmul %73, %75, %cst_60 {dimension_numbers = #tpu.dot_dimension_numbers<[1], [0], [0], [1], [0, 0, 1, 1], [], []>} : vector<16x128xbf16>, vector<128x256xbf16>, vector<16x256xf32> -> vector<16x256xf32>
    %77 = arith.addf %72, %76 : vector<16x256xf32>
    %cst_61 = arith.constant 0.000000e+00 : f32
    %78 = vector.broadcast %cst_61 : f32 to vector<16x256xf32>
    %79 = arith.maximumf %77, %78 : vector<16x256xf32>
    %80 = vector.extract_strided_slice %79 {offsets = [0, 0], sizes = [16, 128], strides = [1, 1]} : vector<16x256xf32> to vector<16x128xf32>
    %81 = vector.extract_strided_slice %79 {offsets = [0, 128], sizes = [16, 128], strides = [1, 1]} : vector<16x256xf32> to vector<16x128xf32>
    %82 = arith.maximumf %80, %81 : vector<16x128xf32>
    %c0_62 = arith.constant 0 : index
    %c0_63 = arith.constant 0 : index
    %83 = vector.load %arg6[%c0_62, %c0_63] : memref<1x128xf32, #tpu.memory_space<vmem>>, vector<1x128xf32>
    %84 = vector.shape_cast %83 : vector<1x128xf32> to vector<1x128xf32>
    %85 = vector.broadcast %84 : vector<1x128xf32> to vector<2x128xf32>
    %86 = vector.extract_strided_slice %82 {offsets = [0, 0], sizes = [2, 128], strides = [1, 1]} : vector<16x128xf32> to vector<2x128xf32>
    %87 = vector.extract_strided_slice %82 {offsets = [2, 0], sizes = [2, 128], strides = [1, 1]} : vector<16x128xf32> to vector<2x128xf32>
    %88 = arith.maximumf %86, %87 : vector<2x128xf32>
    %89 = arith.truncf %88 : vector<2x128xf32> to vector<2x128xbf16>
    %c0_64 = arith.constant 0 : index
    %c0_65 = arith.constant 0 : index
    %c0_66 = arith.constant 0 : index
    %90 = vector.load %arg5[%c0_64, %c0_65, %c0_66] : memref<4x128x128xbf16, #tpu.memory_space<vmem>>, vector<1x128x128xbf16>
    %91 = vector.shape_cast %90 : vector<1x128x128xbf16> to vector<128x128xbf16>
    %cst_67 = arith.constant dense<0.000000e+00> : vector<2x128xf32>
    %92 = tpu.matmul %89, %91, %cst_67 {dimension_numbers = #tpu.dot_dimension_numbers<[1], [0], [0], [1], [0, 0, 1, 1], [], []>} : vector<2x128xbf16>, vector<128x128xbf16>, vector<2x128xf32> -> vector<2x128xf32>
    %93 = arith.addf %85, %92 : vector<2x128xf32>
    %94 = vector.extract_strided_slice %82 {offsets = [4, 0], sizes = [2, 128], strides = [1, 1]} : vector<16x128xf32> to vector<2x128xf32>
    %95 = vector.extract_strided_slice %82 {offsets = [6, 0], sizes = [2, 128], strides = [1, 1]} : vector<16x128xf32> to vector<2x128xf32>
    %96 = arith.maximumf %94, %95 : vector<2x128xf32>
    %97 = arith.truncf %96 : vector<2x128xf32> to vector<2x128xbf16>
    %c1_68 = arith.constant 1 : index
    %c0_69 = arith.constant 0 : index
    %c0_70 = arith.constant 0 : index
    %98 = vector.load %arg5[%c1_68, %c0_69, %c0_70] : memref<4x128x128xbf16, #tpu.memory_space<vmem>>, vector<1x128x128xbf16>
    %99 = vector.shape_cast %98 : vector<1x128x128xbf16> to vector<128x128xbf16>
    %cst_71 = arith.constant dense<0.000000e+00> : vector<2x128xf32>
    %100 = tpu.matmul %97, %99, %cst_71 {dimension_numbers = #tpu.dot_dimension_numbers<[1], [0], [0], [1], [0, 0, 1, 1], [], []>} : vector<2x128xbf16>, vector<128x128xbf16>, vector<2x128xf32> -> vector<2x128xf32>
    %101 = arith.addf %93, %100 : vector<2x128xf32>
    %102 = vector.extract_strided_slice %82 {offsets = [8, 0], sizes = [2, 128], strides = [1, 1]} : vector<16x128xf32> to vector<2x128xf32>
    %103 = vector.extract_strided_slice %82 {offsets = [10, 0], sizes = [2, 128], strides = [1, 1]} : vector<16x128xf32> to vector<2x128xf32>
    %104 = arith.maximumf %102, %103 : vector<2x128xf32>
    %105 = arith.truncf %104 : vector<2x128xf32> to vector<2x128xbf16>
    %c2_72 = arith.constant 2 : index
    %c0_73 = arith.constant 0 : index
    %c0_74 = arith.constant 0 : index
    %106 = vector.load %arg5[%c2_72, %c0_73, %c0_74] : memref<4x128x128xbf16, #tpu.memory_space<vmem>>, vector<1x128x128xbf16>
    %107 = vector.shape_cast %106 : vector<1x128x128xbf16> to vector<128x128xbf16>
    %cst_75 = arith.constant dense<0.000000e+00> : vector<2x128xf32>
    %108 = tpu.matmul %105, %107, %cst_75 {dimension_numbers = #tpu.dot_dimension_numbers<[1], [0], [0], [1], [0, 0, 1, 1], [], []>} : vector<2x128xbf16>, vector<128x128xbf16>, vector<2x128xf32> -> vector<2x128xf32>
    %109 = arith.addf %101, %108 : vector<2x128xf32>
    %110 = vector.extract_strided_slice %82 {offsets = [12, 0], sizes = [2, 128], strides = [1, 1]} : vector<16x128xf32> to vector<2x128xf32>
    %111 = vector.extract_strided_slice %82 {offsets = [14, 0], sizes = [2, 128], strides = [1, 1]} : vector<16x128xf32> to vector<2x128xf32>
    %112 = arith.maximumf %110, %111 : vector<2x128xf32>
    %113 = arith.truncf %112 : vector<2x128xf32> to vector<2x128xbf16>
    %c3_76 = arith.constant 3 : index
    %c0_77 = arith.constant 0 : index
    %c0_78 = arith.constant 0 : index
    %114 = vector.load %arg5[%c3_76, %c0_77, %c0_78] : memref<4x128x128xbf16, #tpu.memory_space<vmem>>, vector<1x128x128xbf16>
    %115 = vector.shape_cast %114 : vector<1x128x128xbf16> to vector<128x128xbf16>
    %cst_79 = arith.constant dense<0.000000e+00> : vector<2x128xf32>
    %116 = tpu.matmul %113, %115, %cst_79 {dimension_numbers = #tpu.dot_dimension_numbers<[1], [0], [0], [1], [0, 0, 1, 1], [], []>} : vector<2x128xbf16>, vector<128x128xbf16>, vector<2x128xf32> -> vector<2x128xf32>
    %117 = arith.addf %109, %116 : vector<2x128xf32>
    %cst_80 = arith.constant 0.000000e+00 : f32
    %118 = vector.broadcast %cst_80 : f32 to vector<2x128xf32>
    %119 = arith.maximumf %117, %118 : vector<2x128xf32>
    %120 = arith.truncf %119 : vector<2x128xf32> to vector<2x128xbf16>
    %c0_81 = arith.constant 0 : index
    %c0_82 = arith.constant 0 : index
    %121 = vector.load %arg7[%c0_81, %c0_82] : memref<128x128xbf16, #tpu.memory_space<vmem>>, vector<128x128xbf16>
    %cst_83 = arith.constant dense<0.000000e+00> : vector<2x128xf32>
    %122 = tpu.matmul %120, %121, %cst_83 {dimension_numbers = #tpu.dot_dimension_numbers<[1], [0], [0], [1], [0, 0, 1, 1], [], []>} : vector<2x128xbf16>, vector<128x128xbf16>, vector<2x128xf32> -> vector<2x128xf32>
    %c0_84 = arith.constant 0 : index
    %c0_85 = arith.constant 0 : index
    %123 = vector.load %arg8[%c0_84, %c0_85] : memref<1x128xf32, #tpu.memory_space<vmem>>, vector<1x128xf32>
    %124 = vector.broadcast %123 : vector<1x128xf32> to vector<2x128xf32>
    %125 = arith.addf %122, %124 : vector<2x128xf32>
    %cst_86 = arith.constant 0.000000e+00 : f32
    %126 = vector.broadcast %cst_86 : f32 to vector<2x128xf32>
    %127 = arith.maximumf %125, %126 : vector<2x128xf32>
    %128 = arith.truncf %127 : vector<2x128xf32> to vector<2x128xbf16>
    %c0_87 = arith.constant 0 : index
    %c0_88 = arith.constant 0 : index
    %129 = vector.load %arg9[%c0_87, %c0_88] : memref<128x128xbf16, #tpu.memory_space<vmem>>, vector<128x128xbf16>
    %cst_89 = arith.constant dense<0.000000e+00> : vector<2x128xf32>
    %130 = tpu.matmul %128, %129, %cst_89 {dimension_numbers = #tpu.dot_dimension_numbers<[1], [0], [0], [1], [0, 0, 1, 1], [], []>} : vector<2x128xbf16>, vector<128x128xbf16>, vector<2x128xf32> -> vector<2x128xf32>
    %c0_90 = arith.constant 0 : index
    %c0_91 = arith.constant 0 : index
    %131 = vector.load %arg10[%c0_90, %c0_91] : memref<1x128xf32, #tpu.memory_space<vmem>>, vector<1x128xf32>
    %132 = vector.broadcast %131 : vector<1x128xf32> to vector<2x128xf32>
    %133 = arith.addf %130, %132 : vector<2x128xf32>
    %c0_92 = arith.constant 0 : index
    %c0_93 = arith.constant 0 : index
    %134 = vector.load %arg11[%c0_92, %c0_93] : memref<2x128xf32, #tpu.memory_space<vmem>>, vector<2x128xf32>
    tpu.vector_store %arg11[%c0_92, %c0_93], %133 {strides = array<i32>} : memref<2x128xf32, #tpu.memory_space<vmem>>, vector<2x128xf32>,
    return
  }
}

</mosaic_0001>

<llo_original>
// kernel: garment_classifier_forward.1
$region0: #{garment_classifier_forward.1}
  #allocation0 [shape = 'u32[]', space=smem, size = 0x4, offset = 0x4, fixed_abs, tag = 'smem constant byte address 0x4 - core index']
  #allocation1 [shape = 'u32[144,128]{1,0:T(1,128)}', space=vmem, size = 0x12000, scoped, tag = 'internal scratch']
  %s0 = inlined_call_operand.vmem [shape: bf16[56,128], index: 0, kind: input, shape index: {}]
  %s1 = inlined_call_operand.hbm [shape: bf16[5,128,256], index: 1, kind: input, shape index: {}]
  %s2 = inlined_call_operand.vmem [shape: f32[1,256], index: 2, kind: input, shape index: {}]
  %s3 = inlined_call_operand.hbm [shape: bf16[5,128,256], index: 3, kind: input, shape index: {}]
  %s4 = inlined_call_operand.vmem [shape: f32[1,256], index: 4, kind: input, shape index: {}]
  %s5 = inlined_call_operand.vmem [shape: bf16[4,128,128], index: 5, kind: input, shape index: {}]
  %s6 = inlined_call_operand.vmem [shape: f32[1,128], index: 6, kind: input, shape index: {}]
  %s7 = inlined_call_operand.vmem [shape: bf16[128,128], index: 7, kind: input, shape index: {}]
  %s8 = inlined_call_operand.vmem [shape: f32[1,128], index: 8, kind: input, shape index: {}]
  %s9 = inlined_call_operand.hbm [shape: bf16[128,128], index: 9, kind: input, shape index: {}]
  %s10 = inlined_call_operand.vmem [shape: f32[1,128], index: 10, kind: input, shape index: {}]
  %s11 = inlined_call_operand.hbm [shape: f32[2,128], index: 11, kind: output, shape index: {}]
  %s12 = sld [smem:[#allocation0]]
  $region66: #{garment_classifier_forward.1} parent=0
    _
  %s14 = ssub.s32 1, %s12
  %s15 = scalar_select 0, %s14, %s12
  $region1: #{garment_classifier_forward.1} parent=0
    #allocation2 [shape = 'u8[327680]{0}', space=vmem, size = 0x50000, scoped, tag = 'input window, operand 1, single buffered']
    #allocation3 [shape = 's32[1]{0}', space=sflag, size = 0x4, scoped, tag = 'scoped memory for garment_classifier_forward.1']
    #allocation4 [shape = 's32[1]{0}', space=sflag, size = 0x4, scoped, tag = 'scoped memory for garment_classifier_forward.1']
    #allocation5 [shape = 'u8[327680]{0}', space=vmem, size = 0x50000, scoped, tag = 'input window, operand 3, single buffered']
    #allocation6 [shape = 's32[1]{0}', space=sflag, size = 0x4, scoped, tag = 'scoped memory for garment_classifier_forward.1']
    #allocation7 [shape = 'u8[32768]{0}', space=vmem, size = 0x8000, scoped, tag = 'input window, operand 9, single buffered']
    #allocation8 [shape = 'u8[1024]{0}', space=vmem, size = 0x400, scoped, tag = 'output window, operand 0, single buffered']
    %16 = vsyncpa [#allocation3], 0
    %17 = vsyncpa [#allocation6], 0
    %18 = vsyncpa [#allocation4], 0
    // Predicated region
    $region2: #{garment_classifier_forward.1} parent=1 // pred_check
      _
    $region3: #{garment_classifier_forward.1} parent=1 // pred_check_branch
      %20 = sbr.rel (0) target = $region5
    $region4: #{garment_classifier_forward.1} parent=1 // pred_region
      _
    $region5: #{garment_classifier_forward.1} parent=1 // pred_fallthru
      _
    // Predicated region
    $region6: #{garment_classifier_forward.1} parent=1 // pred_check
      _
    $region7: #{garment_classifier_forward.1} parent=1 // pred_check_branch
      %22 = sbr.rel (0) target = $region9
    $region8: #{garment_classifier_forward.1} parent=1 // pred_region
      %s24 = ssub.s32 10240, 10240
      %25 = vsyncadd [#allocation3], %s24
      %s26 = sshll.u32 [#allocation2], 4
      %s27 = int_to_ptr.vmem [resolvable:$true] %s26
      %32 = dma.hbm_to_vmem [thread:$0]  %s1, 10240, %s27, [#allocation3], 128, 128, 8
    $region9: #{garment_classifier_forward.1} parent=1 // pred_fallthru
      _
    // Predicated region
    $region10: #{garment_classifier_forward.1} parent=1 // pred_check
      _
    $region11: #{garment_classifier_forward.1} parent=1 // pred_check_branch
      %34 = sbr.rel (0) target = $region13
    $region12: #{garment_classifier_forward.1} parent=1 // pred_region
      _
    $region13: #{garment_classifier_forward.1} parent=1 // pred_fallthru
      _
    // Predicated region
    $region14: #{garment_classifier_forward.1} parent=1 // pred_check
      _
    $region15: #{garment_classifier_forward.1} parent=1 // pred_check_branch
      %36 = sbr.rel (0) target = $region17
    $region16: #{garment_classifier_forward.1} parent=1 // pred_region
      %s38 = ssub.s32 10240, 10240
      %39 = vsyncadd [#allocation6], %s38
      %s40 = sshll.u32 [#allocation5], 4
      %s41 = int_to_ptr.vmem [resolvable:$true] %s40
      %46 = dma.hbm_to_vmem [thread:$0]  %s3, 10240, %s41, [#allocation6], 128, 128, 8
    $region17: #{garment_classifier_forward.1} parent=1 // pred_fallthru
      _
    // Predicated region
    $region18: #{garment_classifier_forward.1} parent=1 // pred_check
      _
    $region19: #{garment_classifier_forward.1} parent=1 // pred_check_branch
      %48 = sbr.rel (0) target = $region21
    $region20: #{garment_classifier_forward.1} parent=1 // pred_region
      _
    $region21: #{garment_classifier_forward.1} parent=1 // pred_fallthru
      _
    // Predicated region
    $region22: #{garment_classifier_forward.1} parent=1 // pred_check
      _
    $region23: #{garment_classifier_forward.1} parent=1 // pred_check_branch
      %50 = sbr.rel (0) target = $region25
    $region24: #{garment_classifier_forward.1} parent=1 // pred_region
      _
    $region25: #{garment_classifier_forward.1} parent=1 // pred_fallthru
      _
    // Predicated region
    $region26: #{garment_classifier_forward.1} parent=1 // pred_check
      _
    $region27: #{garment_classifier_forward.1} parent=1 // pred_check_branch
      %52 = sbr.rel (0) target = $region29
    $region28: #{garment_classifier_forward.1} parent=1 // pred_region
      _
    $region29: #{garment_classifier_forward.1} parent=1 // pred_fallthru
      _
    // Predicated region
    $region30: #{garment_classifier_forward.1} parent=1 // pred_check
      _
    $region31: #{garment_classifier_forward.1} parent=1 // pred_check_branch
      %54 = sbr.rel (0) target = $region33
    $region32: #{garment_classifier_forward.1} parent=1 // pred_region
      _
    $region33: #{garment_classifier_forward.1} parent=1 // pred_fallthru
      _
    // Predicated region
    $region34: #{garment_classifier_forward.1} parent=1 // pred_check
      _
    $region35: #{garment_classifier_forward.1} parent=1 // pred_check_branch
      %56 = sbr.rel (0) target = $region37
    $region36: #{garment_classifier_forward.1} parent=1 // pred_region
      _
    $region37: #{garment_classifier_forward.1} parent=1 // pred_fallthru
      _
    // Predicated region
    $region38: #{garment_classifier_forward.1} parent=1 // pred_check
      _
    $region39: #{garment_classifier_forward.1} parent=1 // pred_check_branch
      %58 = sbr.rel (0) target = $region41
    $region40: #{garment_classifier_forward.1} parent=1 // pred_region
      %s60 = ssub.s32 1024, 1024
      %61 = vsyncadd [#allocation6], %s60
      %s62 = sshll.u32 [#allocation7], 4
      %s63 = int_to_ptr.vmem [resolvable:$true] %s62
      %68 = dma.hbm_to_vmem [thread:$0]  %s9, 1024, %s63, [#allocation6], 64, 64, 4
    $region41: #{garment_classifier_forward.1} parent=1 // pred_fallthru
      _
    // Predicated region
    $region42: #{garment_classifier_forward.1} parent=1 // pred_check
      _
    $region43: #{garment_classifier_forward.1} parent=1 // pred_check_branch
      %70 = sbr.rel (0) target = $region45
    $region44: #{garment_classifier_forward.1} parent=1 // pred_region
      _
    $region45: #{garment_classifier_forward.1} parent=1 // pred_fallthru
      _
    // Predicated region
    $region46: #{garment_classifier_forward.1} parent=1 // pred_check
      _
    $region47: #{garment_classifier_forward.1} parent=1 // pred_check_branch
      %72 = sbr.rel (0) target = $region49
    $region48: #{garment_classifier_forward.1} parent=1 // pred_region
      %73 = dma.done [#allocation3], 10240
    $region49: #{garment_classifier_forward.1} parent=1 // pred_fallthru
      _
    // Predicated region
    $region50: #{garment_classifier_forward.1} parent=1 // pred_check
      _
    $region51: #{garment_classifier_forward.1} parent=1 // pred_check_branch
      %75 = sbr.rel (0) target = $region53
    $region52: #{garment_classifier_forward.1} parent=1 // pred_region
      %76 = dma.done [#allocation6], 10240
    $region53: #{garment_classifier_forward.1} parent=1 // pred_fallthru
      _
    // Predicated region
    $region54: #{garment_classifier_forward.1} parent=1 // pred_check
      _
    $region55: #{garment_classifier_forward.1} parent=1 // pred_check_branch
      %78 = sbr.rel (0) target = $region57
    $region56: #{garment_classifier_forward.1} parent=1 // pred_region
      %79 = dma.done [#allocation6], 1024
    $region57: #{garment_classifier_forward.1} parent=1 // pred_fallthru
      _
    %v81 = vld [vmem:[%s2] sm:$0x3]
    %v83 = vlaneseq
    %v84 = vshrl.u32 %v83, 7
    %v85 = vsub.s32 0, %v84
    %v86 = vrot.slane %v81, %v85
    %v87 = vlaneseq
    %v88 = vshrl.u32 %v87, 7
    %v89 = vsub.s32 1, %v88
    %v90 = vrot.slane %v81, %v89
    %v93 = vld [vmem:[#allocation2] sm:$0xff]
    %v94 = vld [vmem:[#allocation2 + $0x8] sm:$0xff]
    %v95 = vld [vmem:[#allocation2 + $0x10] sm:$0xff]
    %v96 = vld [vmem:[#allocation2 + $0x18] sm:$0xff]
    %v97 = vld [vmem:[#allocation2 + $0x20] sm:$0xff]
    %v98 = vld [vmem:[#allocation2 + $0x28] sm:$0xff]
    %v99 = vld [vmem:[#allocation2 + $0x30] sm:$0xff]
    %v100 = vld [vmem:[#allocation2 + $0x38] sm:$0xff]
    %v101 = vld [vmem:[#allocation2 + $0x40] sm:$0xff]
    %v102 = vld [vmem:[#allocation2 + $0x48] sm:$0xff]
    %v103 = vld [vmem:[#allocation2 + $0x50] sm:$0xff]
    %v104 = vld [vmem:[#allocation2 + $0x58] sm:$0xff]
    %v105 = vld [vmem:[#allocation2 + $0x60] sm:$0xff]
    %v106 = vld [vmem:[#allocation2 + $0x68] sm:$0xff]
    %v107 = vld [vmem:[#allocation2 + $0x70] sm:$0xff]
    %v108 = vld [vmem:[#allocation2 + $0x78] sm:$0xff]
    %v109 = vld [vmem:[%s0] sm:$0xf]
    %v110 = vld [vmem:[%s0 + $0x4] sm:$0xf]
    %v111 = vld [vmem:[%s0 + $0x8] sm:$0xf]
    %v115 = vunpack.c.l.b16 %v109
    %v116 = vunpack.c.l.b16 %v110
    %v117 = vunpack.c.l.b16 %v111
    %v118 = vpack.c.b16 %v116, %v115
    %v119 = vpack.c.b16 %v117, %v117
    %v138 = vunpack.c.l.b16 %v93
    %v139 = vunpack.c.h.b16 %v93
    %v140 = vunpack.c.l.b16 %v94
    %v141 = vunpack.c.h.b16 %v94
    %v142 = vunpack.c.l.b16 %v95
    %v143 = vunpack.c.h.b16 %v95
    %v144 = vunpack.c.l.b16 %v96
    %v145 = vunpack.c.h.b16 %v96
    %v146 = vunpack.c.l.b16 %v97
    %v147 = vunpack.c.h.b16 %v97
    %v148 = vunpack.c.l.b16 %v98
    %v149 = vunpack.c.h.b16 %v98
    %v150 = vunpack.c.l.b16 %v99
    %v151 = vunpack.c.h.b16 %v99
    %v152 = vunpack.c.l.b16 %v100
    %v153 = vunpack.c.h.b16 %v100
    %v154 = vunpack.c.l.b16 %v101
    %v155 = vunpack.c.h.b16 %v101
    %v156 = vunpack.c.l.b16 %v102
    %v157 = vunpack.c.h.b16 %v102
    %v158 = vunpack.c.l.b16 %v103
    %v159 = vunpack.c.h.b16 %v103
    %v160 = vunpack.c.l.b16 %v104
    %v161 = vunpack.c.h.b16 %v104
    %v162 = vunpack.c.l.b16 %v105
    %v163 = vunpack.c.h.b16 %v105
    %v164 = vunpack.c.l.b16 %v106
    %v165 = vunpack.c.h.b16 %v106
    %v166 = vunpack.c.l.b16 %v107
    %v167 = vunpack.c.h.b16 %v107
    %v168 = vunpack.c.l.b16 %v108
    %v169 = vunpack.c.h.b16 %v108
    %v170 = vpack.c.b16 %v140, %v138
    %v171 = vpack.c.b16 %v141, %v139
    %v172 = vpack.c.b16 %v144, %v142
    %v173 = vpack.c.b16 %v145, %v143
    %v174 = vpack.c.b16 %v148, %v146
    %v175 = vpack.c.b16 %v149, %v147
    %v176 = vpack.c.b16 %v152, %v150
    %v177 = vpack.c.b16 %v153, %v151
    %v178 = vpack.c.b16 %v156, %v154
    %v179 = vpack.c.b16 %v157, %v155
    %v180 = vpack.c.b16 %v160, %v158
    %v181 = vpack.c.b16 %v161, %v159
    %v182 = vpack.c.b16 %v164, %v162
    %v183 = vpack.c.b16 %v165, %v163
    %v184 = vpack.c.b16 %v168, %v166
    %v185 = vpack.c.b16 %v169, %v167
    %202 = vmatprep.subr.bf16.mxu0 %v171
    %203 = vmatpush1.bf16.msra.mxu0 %v170
    %204 = vmatprep.subr.bf16.mxu0 %v173
    %205 = vmatpush1.bf16.msra.mxu0 %v172
    %206 = vmatprep.subr.bf16.mxu0 %v175
    %207 = vmatpush1.bf16.msra.mxu0 %v174
    %208 = vmatprep.subr.bf16.mxu0 %v177
    %209 = vmatpush1.bf16.msra.mxu0 %v176
    %210 = vmatprep.subr.bf16.mxu0 %v179
    %211 = vmatpush1.bf16.msra.mxu0 %v178
    %212 = vmatprep.subr.bf16.mxu0 %v181
    %213 = vmatpush1.bf16.msra.mxu0 %v180
    %214 = vmatprep.subr.bf16.mxu0 %v183
    %215 = vmatpush1.bf16.msra.mxu0 %v182
    %216 = vmatprep.subr.bf16.mxu0 %v185
    %217 = vmatpush1.bf16.msra.mxu0 %v184
    %218 = vmatprep.subr.bf16.mxu0 0
    %219 = vmatpush1.bf16.msra.mxu0 0
    %220 = vmatprep.subr.bf16.mxu0 0
    %221 = vmatpush1.bf16.msra.mxu0 0
    %222 = vmatprep.subr.bf16.mxu0 0
    %223 = vmatpush1.bf16.msra.mxu0 0
    %224 = vmatprep.subr.bf16.mxu0 0
    %225 = vmatpush1.bf16.msra.mxu0 0
    %226 = vmatprep.subr.bf16.mxu0 0
    %227 = vmatpush1.bf16.msra.mxu0 0
    %228 = vmatprep.subr.bf16.mxu0 0
    %229 = vmatpush1.bf16.msra.mxu0 0
    %230 = vmatprep.subr.bf16.mxu0 0
    %231 = vmatpush1.bf16.msra.mxu0 0
    %232 = vmatprep.subr.bf16.mxu0 0
    %233 = vmatpush1.bf16.msra.mxu0 0
    %234 = vmatprep.mubr.bf16.mxu0 0
    %235 = vmatmul.mubr.bf16.gmra.mrb[0].mxu0 %v118
    %v236 = vpop.f32.mrb[0].mxu0
    %v237 = vadd.f32 0.0, %v236
    %v238 = vpop.f32.mrb[0].mxu0
    %v239 = vadd.f32 0.0, %v238
    %v240 = vpop.f32.mrb[0].mxu0
    %v241 = vadd.f32 0.0, %v240
    %v242 = vpop.f32.mrb[0].mxu0
    %v243 = vadd.f32 0.0, %v242
    %244 = vmatprep.mubr.bf16.mxu0 0
    %245 = vmatmul.mubr.bf16.gmra.mrb[0].mxu0 %v119
    %v246 = vpop.f32.mrb[0].mxu0
    %v247 = vadd.f32 0.0, %v246
    %v248 = vpop.f32.mrb[0].mxu0
    %v249 = vadd.f32 0.0, %v248
    %v250 = vpop.f32.mrb[0].mxu0
    %v251 = vpop.f32.mrb[0].mxu0
    %252 = vdwg.mxu0
    %v253 = vadd.f32 %v86, %v237
    %v254 = vadd.f32 %v90, %v239
    %v255 = vadd.f32 %v86, %v241
    %v256 = vadd.f32 %v90, %v243
    %v257 = vadd.f32 %v86, %v247
    %v258 = vadd.f32 %v90, %v249
    %v259 = vld [vmem:[%s0 + $0xc] sm:$0xc]
    %v260 = vld [vmem:[%s0 + $0x10] sm:$0xf]
    %v261 = vld [vmem:[%s0 + $0x14] sm:$0xf]
    %v262 = vld [vmem:[%s0 + $0x18] sm:$0x3]
    %v267 = vunpack.c.l.b16 %v259
    %v268 = vunpack.c.l.b16 %v260
    %v269 = vunpack.c.l.b16 %v261
    %v270 = vunpack.c.l.b16 %v262
    %v271 = vpack.c.b16 %v268, %v267
    %v272 = vpack.c.b16 %v270, %v269
    %vm273 = vcmask 1045504
    %v274 = vrot.slane %v271, 2
    %v275 = vrot.slane %v272, 2
    %v276 = vsel %vm273, %v274, %v275
    %279 = vmatprep.subr.bf16.mxu0 %v171
    %280 = vmatpush1.bf16.msra.mxu0 %v170
    %281 = vmatprep.subr.bf16.mxu0 %v173
    %282 = vmatpush1.bf16.msra.mxu0 %v172
    %283 = vmatprep.subr.bf16.mxu0 %v175
    %284 = vmatpush1.bf16.msra.mxu0 %v174
    %285 = vmatprep.subr.bf16.mxu0 %v177
    %286 = vmatpush1.bf16.msra.mxu0 %v176
    %287 = vmatprep.subr.bf16.mxu0 %v179
    %288 = vmatpush1.bf16.msra.mxu0 %v178
    %289 = vmatprep.subr.bf16.mxu0 %v181
    %290 = vmatpush1.bf16.msra.mxu0 %v180
    %291 = vmatprep.subr.bf16.mxu0 %v183
    %292 = vmatpush1.bf16.msra.mxu0 %v182
    %293 = vmatprep.subr.bf16.mxu0 %v185
    %294 = vmatpush1.bf16.msra.mxu0 %v184
    %295 = vmatprep.subr.bf16.mxu0 0
    %296 = vmatpush1.bf16.msra.mxu0 0
    %297 = vmatprep.subr.bf16.mxu0 0
    %298 = vmatpush1.bf16.msra.mxu0 0
    %299 = vmatprep.subr.bf16.mxu0 0
    %300 = vmatpush1.bf16.msra.mxu0 0
    %301 = vmatprep.subr.bf16.mxu0 0
    %302 = vmatpush1.bf16.msra.mxu0 0
    %303 = vmatprep.subr.bf16.mxu0 0
    %304 = vmatpush1.bf16.msra.mxu0 0
    %305 = vmatprep.subr.bf16.mxu0 0
    %306 = vmatpush1.bf16.msra.mxu0 0
    %307 = vmatprep.subr.bf16.mxu0 0
    %308 = vmatpush1.bf16.msra.mxu0 0
    %309 = vmatprep.subr.bf16.mxu0 0
    %310 = vmatpush1.bf16.msra.mxu0 0
    %311 = vmatprep.mubr.bf16.mxu0 0
    %312 = vmatmul.mubr.bf16.gmra.mrb[0].mxu0 %v276
    %v313 = vpop.f32.mrb[0].mxu0
    %v314 = vadd.f32 0.0, %v313
    %v315 = vpop.f32.mrb[0].mxu0
    %v316 = vadd.f32 0.0, %v315
    %v317 = vpop.f32.mrb[0].mxu0
    %v318 = vadd.f32 0.0, %v317
    %v319 = vpop.f32.mrb[0].mxu0
    %v320 = vadd.f32 0.0, %v319
    %321 = vmatprep.mubr.bf16.mxu0 0
    %322 = vmatmul.mubr.bf16.gmra.mrb[0].mxu0 %v275
    %v323 = vpop.f32.mrb[0].mxu0
    %v324 = vadd.f32 0.0, %v323
    %v325 = vpop.f32.mrb[0].mxu0
    %v326 = vadd.f32 0.0, %v325
    %v327 = vpop.f32.mrb[0].mxu0
    %v328 = vpop.f32.mrb[0].mxu0
    %329 = vdwg.mxu0
    %v330 = vadd.f32 %v86, %v314
    %v331 = vadd.f32 %v90, %v316
    %v332 = vadd.f32 %v86, %v318
    %v333 = vadd.f32 %v90, %v320
    %v334 = vadd.f32 %v86, %v324
    %v335 = vadd.f32 %v90, %v326
    %s336 = scalar_lea.vmem [#allocation2], 128
    %v337 = vld [vmem:[%s336] sm:$0xff]
    %v338 = vld [vmem:[%s336 + $0x8] sm:$0xff]
    %v339 = vld [vmem:[%s336 + $0x10] sm:$0xff]
    %v340 = vld [vmem:[%s336 + $0x18] sm:$0xff]
    %v341 = vld [vmem:[%s336 + $0x20] sm:$0xff]
    %v342 = vld [vmem:[%s336 + $0x28] sm:$0xff]
    %v343 = vld [vmem:[%s336 + $0x30] sm:$0xff]
    %v344 = vld [vmem:[%s336 + $0x38] sm:$0xff]
    %v345 = vld [vmem:[%s336 + $0x40] sm:$0xff]
    %v346 = vld [vmem:[%s336 + $0x48] sm:$0xff]
    %v347 = vld [vmem:[%s336 + $0x50] sm:$0xff]
    %v348 = vld [vmem:[%s336 + $0x58] sm:$0xff]
    %v349 = vld [vmem:[%s336 + $0x60] sm:$0xff]
    %v350 = vld [vmem:[%s336 + $0x68] sm:$0xff]
    %v351 = vld [vmem:[%s336 + $0x70] sm:$0xff]
    %v352 = vld [vmem:[%s336 + $0x78] sm:$0xff]
    %v369 = vunpack.c.l.b16 %v337
    %v370 = vunpack.c.h.b16 %v337
    %v371 = vunpack.c.l.b16 %v338
    %v372 = vunpack.c.h.b16 %v338
    %v373 = vunpack.c.l.b16 %v339
    %v374 = vunpack.c.h.b16 %v339
    %v375 = vunpack.c.l.b16 %v340
    %v376 = vunpack.c.h.b16 %v340
    %v377 = vunpack.c.l.b16 %v341
    %v378 = vunpack.c.h.b16 %v341
    %v379 = vunpack.c.l.b16 %v342
    %v380 = vunpack.c.h.b16 %v342
    %v381 = vunpack.c.l.b16 %v343
    %v382 = vunpack.c.h.b16 %v343
    %v383 = vunpack.c.l.b16 %v344
    %v384 = vunpack.c.h.b16 %v344
    %v385 = vunpack.c.l.b16 %v345
    %v386 = vunpack.c.h.b16 %v345
    %v387 = vunpack.c.l.b16 %v346
    %v388 = vunpack.c.h.b16 %v346
    %v389 = vunpack.c.l.b16 %v347
    %v390 = vunpack.c.h.b16 %v347
    %v391 = vunpack.c.l.b16 %v348
    %v392 = vunpack.c.h.b16 %v348
    %v393 = vunpack.c.l.b16 %v349
    %v394 = vunpack.c.h.b16 %v349
    %v395 = vunpack.c.l.b16 %v350
    %v396 = vunpack.c.h.b16 %v350
    %v397 = vunpack.c.l.b16 %v351
    %v398 = vunpack.c.h.b16 %v351
    %v399 = vunpack.c.l.b16 %v352
    %v400 = vunpack.c.h.b16 %v352
    %v401 = vpack.c.b16 %v371, %v369
    %v402 = vpack.c.b16 %v372, %v370
    %v403 = vpack.c.b16 %v375, %v373
    %v404 = vpack.c.b16 %v376, %v374
    %v405 = vpack.c.b16 %v379, %v377
    %v406 = vpack.c.b16 %v380, %v378
    %v407 = vpack.c.b16 %v383, %v381
    %v408 = vpack.c.b16 %v384, %v382
    %v409 = vpack.c.b16 %v387, %v385
    %v410 = vpack.c.b16 %v388, %v386
    %v411 = vpack.c.b16 %v391, %v389
    %v412 = vpack.c.b16 %v392, %v390
    %v413 = vpack.c.b16 %v395, %v393
    %v414 = vpack.c.b16 %v396, %v394
    %v415 = vpack.c.b16 %v399, %v397
    %v416 = vpack.c.b16 %v400, %v398
    %433 = vmatprep.subr.bf16.mxu0 %v402
    %434 = vmatpush1.bf16.msra.mxu0 %v401
    %435 = vmatprep.subr.bf16.mxu0 %v404
    %436 = vmatpush1.bf16.msra.mxu0 %v403
    %437 = vmatprep.subr.bf16.mxu0 %v406
    %438 = vmatpush1.bf16.msra.mxu0 %v405
    %439 = vmatprep.subr.bf16.mxu0 %v408
    %440 = vmatpush1.bf16.msra.mxu0 %v407
    %441 = vmatprep.subr.bf16.mxu0 %v410
    %442 = vmatpush1.bf16.msra.mxu0 %v409
    %443 = vmatprep.subr.bf16.mxu0 %v412
    %444 = vmatpush1.bf16.msra.mxu0 %v411
    %445 = vmatprep.subr.bf16.mxu0 %v414
    %446 = vmatpush1.bf16.msra.mxu0 %v413
    %447 = vmatprep.subr.bf16.mxu0 %v416
    %448 = vmatpush1.bf16.msra.mxu0 %v415
    %449 = vmatprep.subr.bf16.mxu0 0
    %450 = vmatpush1.bf16.msra.mxu0 0
    %451 = vmatprep.subr.bf16.mxu0 0
    %452 = vmatpush1.bf16.msra.mxu0 0
    %453 = vmatprep.subr.bf16.mxu0 0
    %454 = vmatpush1.bf16.msra.mxu0 0
    %455 = vmatprep.subr.bf16.mxu0 0
    %456 = vmatpush1.bf16.msra.mxu0 0
    %457 = vmatprep.subr.bf16.mxu0 0
    %458 = vmatpush1.bf16.msra.mxu0 0
    %459 = vmatprep.subr.bf16.mxu0 0
    %460 = vmatpush1.bf16.msra.mxu0 0
    %461 = vmatprep.subr.bf16.mxu0 0
    %462 = vmatpush1.bf16.msra.mxu0 0
    %463 = vmatprep.subr.bf16.mxu0 0
    %464 = vmatpush1.bf16.msra.mxu0 0
    %465 = vmatprep.mubr.bf16.mxu0 0
    %466 = vmatmul.mubr.bf16.gmra.mrb[0].mxu0 %v276
    %v467 = vpop.f32.mrb[0].mxu0
    %v468 = vadd.f32 0.0, %v467
    %v469 = vpop.f32.mrb[0].mxu0
    %v470 = vadd.f32 0.0, %v469
    %v471 = vpop.f32.mrb[0].mxu0
    %v472 = vadd.f32 0.0, %v471
    %v473 = vpop.f32.mrb[0].mxu0
    %v474 = vadd.f32 0.0, %v473
    %475 = vmatprep.mubr.bf16.mxu0 0
    %476 = vmatmul.mubr.bf16.gmra.mrb[0].mxu0 %v275
    %v477 = vpop.f32.mrb[0].mxu0
    %v478 = vadd.f32 0.0, %v477
    %v479 = vpop.f32.mrb[0].mxu0
    %v480 = vadd.f32 0.0, %v479
    %v481 = vpop.f32.mrb[0].mxu0
    %v482 = vpop.f32.mrb[0].mxu0
    %483 = vdwg.mxu0
    %v484 = vadd.f32 %v253, %v468
    %v485 = vadd.f32 %v254, %v470
    %v486 = vadd.f32 %v255, %v472
    %v487 = vadd.f32 %v256, %v474
    %v488 = vadd.f32 %v257, %v478
    %v489 = vadd.f32 %v258, %v480
    %v490 = vld [vmem:[%s0] sm:$0xe]
    %v491 = vld [vmem:[%s0 + $0x4] sm:$0xf]
    %v492 = vld [vmem:[%s0 + $0x8] sm:$0xf]
    %v493 = vld [vmem:[%s0 + $0xc] sm:$0x1]
    %v498 = vunpack.c.l.b16 %v490
    %v499 = vunpack.c.l.b16 %v491
    %v500 = vunpack.c.l.b16 %v492
    %v501 = vunpack.c.l.b16 %v493
    %v502 = vpack.c.b16 %v499, %v498
    %v503 = vpack.c.b16 %v501, %v500
    %vm504 = vcmask 1046528
    %v505 = vrot.slane %v502, 1
    %v506 = vrot.slane %v503, 1
    %v507 = vsel %vm504, %v505, %v506
    %510 = vmatprep.subr.bf16.mxu0 %v402
    %511 = vmatpush1.bf16.msra.mxu0 %v401
    %512 = vmatprep.subr.bf16.mxu0 %v404
    %513 = vmatpush1.bf16.msra.mxu0 %v403
    %514 = vmatprep.subr.bf16.mxu0 %v406
    %515 = vmatpush1.bf16.msra.mxu0 %v405
    %516 = vmatprep.subr.bf16.mxu0 %v408
    %517 = vmatpush1.bf16.msra.mxu0 %v407
    %518 = vmatprep.subr.bf16.mxu0 %v410
    %519 = vmatpush1.bf16.msra.mxu0 %v409
    %520 = vmatprep.subr.bf16.mxu0 %v412
    %521 = vmatpush1.bf16.msra.mxu0 %v411
    %522 = vmatprep.subr.bf16.mxu0 %v414
    %523 = vmatpush1.bf16.msra.mxu0 %v413
    %524 = vmatprep.subr.bf16.mxu0 %v416
    %525 = vmatpush1.bf16.msra.mxu0 %v415
    %526 = vmatprep.subr.bf16.mxu0 0
    %527 = vmatpush1.bf16.msra.mxu0 0
    %528 = vmatprep.subr.bf16.mxu0 0
    %529 = vmatpush1.bf16.msra.mxu0 0
    %530 = vmatprep.subr.bf16.mxu0 0
    %531 = vmatpush1.bf16.msra.mxu0 0
    %532 = vmatprep.subr.bf16.mxu0 0
    %533 = vmatpush1.bf16.msra.mxu0 0
    %534 = vmatprep.subr.bf16.mxu0 0
    %535 = vmatpush1.bf16.msra.mxu0 0
    %536 = vmatprep.subr.bf16.mxu0 0
    %537 = vmatpush1.bf16.msra.mxu0 0
    %538 = vmatprep.subr.bf16.mxu0 0
    %539 = vmatpush1.bf16.msra.mxu0 0
    %540 = vmatprep.subr.bf16.mxu0 0
    %541 = vmatpush1.bf16.msra.mxu0 0
    %542 = vmatprep.mubr.bf16.mxu0 0
    %543 = vmatmul.mubr.bf16.gmra.mrb[0].mxu0 %v507
    %v544 = vpop.f32.mrb[0].mxu0
    %v545 = vadd.f32 0.0, %v544
    %v546 = vpop.f32.mrb[0].mxu0
    %v547 = vadd.f32 0.0, %v546
    %v548 = vpop.f32.mrb[0].mxu0
    %v549 = vadd.f32 0.0, %v548
    %v550 = vpop.f32.mrb[0].mxu0
    %v551 = vadd.f32 0.0, %v550
    %552 = vmatprep.mubr.bf16.mxu0 0
    %553 = vmatmul.mubr.bf16.gmra.mrb[0].mxu0 %v506
    %v554 = vpop.f32.mrb[0].mxu0
    %v555 = vadd.f32 0.0, %v554
    %v556 = vpop.f32.mrb[0].mxu0
    %v557 = vadd.f32 0.0, %v556
    %v558 = vpop.f32.mrb[0].mxu0
    %v559 = vpop.f32.mrb[0].mxu0
    %560 = vdwg.mxu0
    %v561 = vadd.f32 %v330, %v545
    %v562 = vadd.f32 %v331, %v547
    %v563 = vadd.f32 %v332, %v549
    %v564 = vadd.f32 %v333, %v551
    %v565 = vadd.f32 %v334, %v555
    %v566 = vadd.f32 %v335, %v557
    %s567 = scalar_lea.vmem [#allocation2], 256
    %v568 = vld [vmem:[%s567] sm:$0xff]
    %v569 = vld [vmem:[%s567 + $0x8] sm:$0xff]
    %v570 = vld [vmem:[%s567 + $0x10] sm:$0xff]
    %v571 = vld [vmem:[%s567 + $0x18] sm:$0xff]
    %v572 = vld [vmem:[%s567 + $0x20] sm:$0xff]
    %v573 = vld [vmem:[%s567 + $0x28] sm:$0xff]
    %v574 = vld [vmem:[%s567 + $0x30] sm:$0xff]
    %v575 = vld [vmem:[%s567 + $0x38] sm:$0xff]
    %v576 = vld [vmem:[%s567 + $0x40] sm:$0xff]
    %v577 = vld [vmem:[%s567 + $0x48] sm:$0xff]
    %v578 = vld [vmem:[%s567 + $0x50] sm:$0xff]
    %v579 = vld [vmem:[%s567 + $0x58] sm:$0xff]
    %v580 = vld [vmem:[%s567 + $0x60] sm:$0xff]
    %v581 = vld [vmem:[%s567 + $0x68] sm:$0xff]
    %v582 = vld [vmem:[%s567 + $0x70] sm:$0xff]
    %v583 = vld [vmem:[%s567 + $0x78] sm:$0xff]
    %v600 = vunpack.c.l.b16 %v568
    %v601 = vunpack.c.h.b16 %v568
    %v602 = vunpack.c.l.b16 %v569
    %v603 = vunpack.c.h.b16 %v569
    %v604 = vunpack.c.l.b16 %v570
    %v605 = vunpack.c.h.b16 %v570
    %v606 = vunpack.c.l.b16 %v571
    %v607 = vunpack.c.h.b16 %v571
    %v608 = vunpack.c.l.b16 %v572
    %v609 = vunpack.c.h.b16 %v572
    %v610 = vunpack.c.l.b16 %v573
    %v611 = vunpack.c.h.b16 %v573
    %v612 = vunpack.c.l.b16 %v574
    %v613 = vunpack.c.h.b16 %v574
    %v614 = vunpack.c.l.b16 %v575
    %v615 = vunpack.c.h.b16 %v575
    %v616 = vunpack.c.l.b16 %v576
    %v617 = vunpack.c.h.b16 %v576
    %v618 = vunpack.c.l.b16 %v577
    %v619 = vunpack.c.h.b16 %v577
    %v620 = vunpack.c.l.b16 %v578
    %v621 = vunpack.c.h.b16 %v578
    %v622 = vunpack.c.l.b16 %v579
    %v623 = vunpack.c.h.b16 %v579
    %v624 = vunpack.c.l.b16 %v580
    %v625 = vunpack.c.h.b16 %v580
    %v626 = vunpack.c.l.b16 %v581
    %v627 = vunpack.c.h.b16 %v581
    %v628 = vunpack.c.l.b16 %v582
    %v629 = vunpack.c.h.b16 %v582
    %v630 = vunpack.c.l.b16 %v583
    %v631 = vunpack.c.h.b16 %v583
    %v632 = vpack.c.b16 %v602, %v600
    %v633 = vpack.c.b16 %v603, %v601
    %v634 = vpack.c.b16 %v606, %v604
    %v635 = vpack.c.b16 %v607, %v605
    %v636 = vpack.c.b16 %v610, %v608
    %v637 = vpack.c.b16 %v611, %v609
    %v638 = vpack.c.b16 %v614, %v612
    %v639 = vpack.c.b16 %v615, %v613
    %v640 = vpack.c.b16 %v618, %v616
    %v641 = vpack.c.b16 %v619, %v617
    %v642 = vpack.c.b16 %v622, %v620
    %v643 = vpack.c.b16 %v623, %v621
    %v644 = vpack.c.b16 %v626, %v624
    %v645 = vpack.c.b16 %v627, %v625
    %v646 = vpack.c.b16 %v630, %v628
    %v647 = vpack.c.b16 %v631, %v629
    %664 = vmatprep.subr.bf16.mxu0 %v633
    %665 = vmatpush1.bf16.msra.mxu0 %v632
    %666 = vmatprep.subr.bf16.mxu0 %v635
    %667 = vmatpush1.bf16.msra.mxu0 %v634
    %668 = vmatprep.subr.bf16.mxu0 %v637
    %669 = vmatpush1.bf16.msra.mxu0 %v636
    %670 = vmatprep.subr.bf16.mxu0 %v639
    %671 = vmatpush1.bf16.msra.mxu0 %v638
    %672 = vmatprep.subr.bf16.mxu0 %v641
    %673 = vmatpush1.bf16.msra.mxu0 %v640
    %674 = vmatprep.subr.bf16.mxu0 %v643
    %675 = vmatpush1.bf16.msra.mxu0 %v642
    %676 = vmatprep.subr.bf16.mxu0 %v645
    %677 = vmatpush1.bf16.msra.mxu0 %v644
    %678 = vmatprep.subr.bf16.mxu0 %v647
    %679 = vmatpush1.bf16.msra.mxu0 %v646
    %680 = vmatprep.subr.bf16.mxu0 0
    %681 = vmatpush1.bf16.msra.mxu0 0
    %682 = vmatprep.subr.bf16.mxu0 0
    %683 = vmatpush1.bf16.msra.mxu0 0
    %684 = vmatprep.subr.bf16.mxu0 0
    %685 = vmatpush1.bf16.msra.mxu0 0
    %686 = vmatprep.subr.bf16.mxu0 0
    %687 = vmatpush1.bf16.msra.mxu0 0
    %688 = vmatprep.subr.bf16.mxu0 0
    %689 = vmatpush1.bf16.msra.mxu0 0
    %690 = vmatprep.subr.bf16.mxu0 0
    %691 = vmatpush1.bf16.msra.mxu0 0
    %692 = vmatprep.subr.bf16.mxu0 0
    %693 = vmatpush1.bf16.msra.mxu0 0
    %694 = vmatprep.subr.bf16.mxu0 0
    %695 = vmatpush1.bf16.msra.mxu0 0
    %696 = vmatprep.mubr.bf16.mxu0 0
    %697 = vmatmul.mubr.bf16.gmra.mrb[0].mxu0 %v507
    %v698 = vpop.f32.mrb[0].mxu0
    %v699 = vadd.f32 0.0, %v698
    %v700 = vpop.f32.mrb[0].mxu0
    %v701 = vadd.f32 0.0, %v700
    %v702 = vpop.f32.mrb[0].mxu0
    %v703 = vadd.f32 0.0, %v702
    %v704 = vpop.f32.mrb[0].mxu0
    %v705 = vadd.f32 0.0, %v704
    %706 = vmatprep.mubr.bf16.mxu0 0
    %707 = vmatmul.mubr.bf16.gmra.mrb[0].mxu0 %v506
    %v708 = vpop.f32.mrb[0].mxu0
    %v709 = vadd.f32 0.0, %v708
    %v710 = vpop.f32.mrb[0].mxu0
    %v711 = vadd.f32 0.0, %v710
    %v712 = vpop.f32.mrb[0].mxu0
    %v713 = vpop.f32.mrb[0].mxu0
    %714 = vdwg.mxu0
    %v715 = vadd.f32 %v484, %v699
    %v716 = vadd.f32 %v485, %v701
    %v717 = vadd.f32 %v486, %v703
    %v718 = vadd.f32 %v487, %v705
    %v719 = vadd.f32 %v488, %v709
    %v720 = vadd.f32 %v489, %v711
    %v721 = vld [vmem:[%s0 + $0xc] sm:$0x8]
    %v722 = vld [vmem:[%s0 + $0x18] sm:$0x7]
    %v725 = vunpack.c.l.b16 %v721
    %v726 = vunpack.c.l.b16 %v722
    %v727 = vpack.c.b16 %v268, %v725
    %v728 = vpack.c.b16 %v726, %v269
    %vm729 = vcmask 1044480
    %v730 = vrot.slane %v727, 3
    %v731 = vrot.slane %v728, 3
    %v732 = vsel %vm729, %v730, %v731
    %735 = vmatprep.subr.bf16.mxu0 %v633
    %736 = vmatpush1.bf16.msra.mxu0 %v632
    %737 = vmatprep.subr.bf16.mxu0 %v635
    %738 = vmatpush1.bf16.msra.mxu0 %v634
    %739 = vmatprep.subr.bf16.mxu0 %v637
    %740 = vmatpush1.bf16.msra.mxu0 %v636
    %741 = vmatprep.subr.bf16.mxu0 %v639
    %742 = vmatpush1.bf16.msra.mxu0 %v638
    %743 = vmatprep.subr.bf16.mxu0 %v641
    %744 = vmatpush1.bf16.msra.mxu0 %v640
    %745 = vmatprep.subr.bf16.mxu0 %v643
    %746 = vmatpush1.bf16.msra.mxu0 %v642
    %747 = vmatprep.subr.bf16.mxu0 %v645
    %748 = vmatpush1.bf16.msra.mxu0 %v644
    %749 = vmatprep.subr.bf16.mxu0 %v647
    %750 = vmatpush1.bf16.msra.mxu0 %v646
    %751 = vmatprep.subr.bf16.mxu0 0
    %752 = vmatpush1.bf16.msra.mxu0 0
    %753 = vmatprep.subr.bf16.mxu0 0
    %754 = vmatpush1.bf16.msra.mxu0 0
    %755 = vmatprep.subr.bf16.mxu0 0
    %756 = vmatpush1.bf16.msra.mxu0 0
    %757 = vmatprep.subr.bf16.mxu0 0
    %758 = vmatpush1.bf16.msra.mxu0 0
    %759 = vmatprep.subr.bf16.mxu0 0
    %760 = vmatpush1.bf16.msra.mxu0 0
    %761 = vmatprep.subr.bf16.mxu0 0
    %762 = vmatpush1.bf16.msra.mxu0 0
    %763 = vmatprep.subr.bf16.mxu0 0
    %764 = vmatpush1.bf16.msra.mxu0 0
    %765 = vmatprep.subr.bf16.mxu0 0
    %766 = vmatpush1.bf16.msra.mxu0 0
    %767 = vmatprep.mubr.bf16.mxu0 0
    %768 = vmatmul.mubr.bf16.gmra.mrb[0].mxu0 %v732
    %v769 = vpop.f32.mrb[0].mxu0
    %v770 = vadd.f32 0.0, %v769
    %v771 = vpop.f32.mrb[0].mxu0
    %v772 = vadd.f32 0.0, %v771
    %v773 = vpop.f32.mrb[0].mxu0
    %v774 = vadd.f32 0.0, %v773
    %v775 = vpop.f32.mrb[0].mxu0
    %v776 = vadd.f32 0.0, %v775
    %777 = vmatprep.mubr.bf16.mxu0 0
    %778 = vmatmul.mubr.bf16.gmra.mrb[0].mxu0 %v731
    %v779 = vpop.f32.mrb[0].mxu0
    %v780 = vadd.f32 0.0, %v779
    %v781 = vpop.f32.mrb[0].mxu0
    %v782 = vadd.f32 0.0, %v781
    %v783 = vpop.f32.mrb[0].mxu0
    %v784 = vpop.f32.mrb[0].mxu0
    %785 = vdwg.mxu0
    %v786 = vadd.f32 %v561, %v770
    %v787 = vadd.f32 %v562, %v772
    %v788 = vadd.f32 %v563, %v774
    %v789 = vadd.f32 %v564, %v776
    %v790 = vadd.f32 %v565, %v780
    %v791 = vadd.f32 %v566, %v782
    %s792 = scalar_lea.vmem [#allocation2], 384
    %v793 = vld [vmem:[%s792] sm:$0xff]
    %v794 = vld [vmem:[%s792 + $0x8] sm:$0xff]
    %v795 = vld [vmem:[%s792 + $0x10] sm:$0xff]
    %v796 = vld [vmem:[%s792 + $0x18] sm:$0xff]
    %v797 = vld [vmem:[%s792 + $0x20] sm:$0xff]
    %v798 = vld [vmem:[%s792 + $0x28] sm:$0xff]
    %v799 = vld [vmem:[%s792 + $0x30] sm:$0xff]
    %v800 = vld [vmem:[%s792 + $0x38] sm:$0xff]
    %v801 = vld [vmem:[%s792 + $0x40] sm:$0xff]
    %v802 = vld [vmem:[%s792 + $0x48] sm:$0xff]
    %v803 = vld [vmem:[%s792 + $0x50] sm:$0xff]
    %v804 = vld [vmem:[%s792 + $0x58] sm:$0xff]
    %v805 = vld [vmem:[%s792 + $0x60] sm:$0xff]
    %v806 = vld [vmem:[%s792 + $0x68] sm:$0xff]
    %v807 = vld [vmem:[%s792 + $0x70] sm:$0xff]
    %v808 = vld [vmem:[%s792 + $0x78] sm:$0xff]
    %v825 = vunpack.c.l.b16 %v793
    %v826 = vunpack.c.h.b16 %v793
    %v827 = vunpack.c.l.b16 %v794
    %v828 = vunpack.c.h.b16 %v794
    %v829 = vunpack.c.l.b16 %v795
    %v830 = vunpack.c.h.b16 %v795
    %v831 = vunpack.c.l.b16 %v796
    %v832 = vunpack.c.h.b16 %v796
    %v833 = vunpack.c.l.b16 %v797
    %v834 = vunpack.c.h.b16 %v797
    %v835 = vunpack.c.l.b16 %v798
    %v836 = vunpack.c.h.b16 %v798
    %v837 = vunpack.c.l.b16 %v799
    %v838 = vunpack.c.h.b16 %v799
    %v839 = vunpack.c.l.b16 %v800
    %v840 = vunpack.c.h.b16 %v800
    %v841 = vunpack.c.l.b16 %v801
    %v842 = vunpack.c.h.b16 %v801
    %v843 = vunpack.c.l.b16 %v802
    %v844 = vunpack.c.h.b16 %v802
    %v845 = vunpack.c.l.b16 %v803
    %v846 = vunpack.c.h.b16 %v803
    %v847 = vunpack.c.l.b16 %v804
    %v848 = vunpack.c.h.b16 %v804
    %v849 = vunpack.c.l.b16 %v805
    %v850 = vunpack.c.h.b16 %v805
    %v851 = vunpack.c.l.b16 %v806
    %v852 = vunpack.c.h.b16 %v806
    %v853 = vunpack.c.l.b16 %v807
    %v854 = vunpack.c.h.b16 %v807
    %v855 = vunpack.c.l.b16 %v808
    %v856 = vunpack.c.h.b16 %v808
    %v857 = vpack.c.b16 %v827, %v825
    %v858 = vpack.c.b16 %v828, %v826
    %v859 = vpack.c.b16 %v831, %v829
    %v860 = vpack.c.b16 %v832, %v830
    %v861 = vpack.c.b16 %v835, %v833
    %v862 = vpack.c.b16 %v836, %v834
    %v863 = vpack.c.b16 %v839, %v837
    %v864 = vpack.c.b16 %v840, %v838
    %v865 = vpack.c.b16 %v843, %v841
    %v866 = vpack.c.b16 %v844, %v842
    %v867 = vpack.c.b16 %v847, %v845
    %v868 = vpack.c.b16 %v848, %v846
    %v869 = vpack.c.b16 %v851, %v849
    %v870 = vpack.c.b16 %v852, %v850
    %v871 = vpack.c.b16 %v855, %v853
    %v872 = vpack.c.b16 %v856, %v854
    %889 = vmatprep.subr.bf16.mxu0 %v858
    %890 = vmatpush1.bf16.msra.mxu0 %v857
    %891 = vmatprep.subr.bf16.mxu0 %v860
    %892 = vmatpush1.bf16.msra.mxu0 %v859
    %893 = vmatprep.subr.bf16.mxu0 %v862
    %894 = vmatpush1.bf16.msra.mxu0 %v861
    %895 = vmatprep.subr.bf16.mxu0 %v864
    %896 = vmatpush1.bf16.msra.mxu0 %v863
    %897 = vmatprep.subr.bf16.mxu0 %v866
    %898 = vmatpush1.bf16.msra.mxu0 %v865
    %899 = vmatprep.subr.bf16.mxu0 %v868
    %900 = vmatpush1.bf16.msra.mxu0 %v867
    %901 = vmatprep.subr.bf16.mxu0 %v870
    %902 = vmatpush1.bf16.msra.mxu0 %v869
    %903 = vmatprep.subr.bf16.mxu0 %v872
    %904 = vmatpush1.bf16.msra.mxu0 %v871
    %905 = vmatprep.subr.bf16.mxu0 0
    %906 = vmatpush1.bf16.msra.mxu0 0
    %907 = vmatprep.subr.bf16.mxu0 0
    %908 = vmatpush1.bf16.msra.mxu0 0
    %909 = vmatprep.subr.bf16.mxu0 0
    %910 = vmatpush1.bf16.msra.mxu0 0
    %911 = vmatprep.subr.bf16.mxu0 0
    %912 = vmatpush1.bf16.msra.mxu0 0
    %913 = vmatprep.subr.bf16.mxu0 0
    %914 = vmatpush1.bf16.msra.mxu0 0
    %915 = vmatprep.subr.bf16.mxu0 0
    %916 = vmatpush1.bf16.msra.mxu0 0
    %917 = vmatprep.subr.bf16.mxu0 0
    %918 = vmatpush1.bf16.msra.mxu0 0
    %919 = vmatprep.subr.bf16.mxu0 0
    %920 = vmatpush1.bf16.msra.mxu0 0
    %921 = vmatprep.mubr.bf16.mxu0 0
    %922 = vmatmul.mubr.bf16.gmra.mrb[0].mxu0 %v732
    %v923 = vpop.f32.mrb[0].mxu0
    %v924 = vadd.f32 0.0, %v923
    %v925 = vpop.f32.mrb[0].mxu0
    %v926 = vadd.f32 0.0, %v925
    %v927 = vpop.f32.mrb[0].mxu0
    %v928 = vadd.f32 0.0, %v927
    %v929 = vpop.f32.mrb[0].mxu0
    %v930 = vadd.f32 0.0, %v929
    %931 = vmatprep.mubr.bf16.mxu0 0
    %932 = vmatmul.mubr.bf16.gmra.mrb[0].mxu0 %v731
    %v933 = vpop.f32.mrb[0].mxu0
    %v934 = vadd.f32 0.0, %v933
    %v935 = vpop.f32.mrb[0].mxu0
    %v936 = vadd.f32 0.0, %v935
    %v937 = vpop.f32.mrb[0].mxu0
    %v938 = vpop.f32.mrb[0].mxu0
    %939 = vdwg.mxu0
    %v940 = vadd.f32 %v715, %v924
    %v941 = vadd.f32 %v716, %v926
    %v942 = vadd.f32 %v717, %v928
    %v943 = vadd.f32 %v718, %v930
    %v944 = vadd.f32 %v719, %v934
    %v945 = vadd.f32 %v720, %v936
    %v946 = vld [vmem:[%s0] sm:$0xc]
    %v947 = vld [vmem:[%s0 + $0xc] sm:$0x3]
    %v950 = vunpack.c.l.b16 %v946
    %v951 = vunpack.c.l.b16 %v947
    %v952 = vpack.c.b16 %v499, %v950
    %v953 = vpack.c.b16 %v951, %v500
    %v954 = vrot.slane %v952, 2
    %v955 = vrot.slane %v953, 2
    %v956 = vsel %vm273, %v954, %v955
    %959 = vmatprep.subr.bf16.mxu0 %v858
    %960 = vmatpush1.bf16.msra.mxu0 %v857
    %961 = vmatprep.subr.bf16.mxu0 %v860
    %962 = vmatpush1.bf16.msra.mxu0 %v859
    %963 = vmatprep.subr.bf16.mxu0 %v862
    %964 = vmatpush1.bf16.msra.mxu0 %v861
    %965 = vmatprep.subr.bf16.mxu0 %v864
    %966 = vmatpush1.bf16.msra.mxu0 %v863
    %967 = vmatprep.subr.bf16.mxu0 %v866
    %968 = vmatpush1.bf16.msra.mxu0 %v865
    %969 = vmatprep.subr.bf16.mxu0 %v868
    %970 = vmatpush1.bf16.msra.mxu0 %v867
    %971 = vmatprep.subr.bf16.mxu0 %v870
    %972 = vmatpush1.bf16.msra.mxu0 %v869
    %973 = vmatprep.subr.bf16.mxu0 %v872
    %974 = vmatpush1.bf16.msra.mxu0 %v871
    %975 = vmatprep.subr.bf16.mxu0 0
    %976 = vmatpush1.bf16.msra.mxu0 0
    %977 = vmatprep.subr.bf16.mxu0 0
    %978 = vmatpush1.bf16.msra.mxu0 0
    %979 = vmatprep.subr.bf16.mxu0 0
    %980 = vmatpush1.bf16.msra.mxu0 0
    %981 = vmatprep.subr.bf16.mxu0 0
    %982 = vmatpush1.bf16.msra.mxu0 0
    %983 = vmatprep.subr.bf16.mxu0 0
    %984 = vmatpush1.bf16.msra.mxu0 0
    %985 = vmatprep.subr.bf16.mxu0 0
    %986 = vmatpush1.bf16.msra.mxu0 0
    %987 = vmatprep.subr.bf16.mxu0 0
    %988 = vmatpush1.bf16.msra.mxu0 0
    %989 = vmatprep.subr.bf16.mxu0 0
    %990 = vmatpush1.bf16.msra.mxu0 0
    %991 = vmatprep.mubr.bf16.mxu0 0
    %992 = vmatmul.mubr.bf16.gmra.mrb[0].mxu0 %v956
    %v993 = vpop.f32.mrb[0].mxu0
    %v994 = vadd.f32 0.0, %v993
    %v995 = vpop.f32.mrb[0].mxu0
    %v996 = vadd.f32 0.0, %v995
    %v997 = vpop.f32.mrb[0].mxu0
    %v998 = vadd.f32 0.0, %v997
    %v999 = vpop.f32.mrb[0].mxu0
    %v1000 = vadd.f32 0.0, %v999
    %1001 = vmatprep.mubr.bf16.mxu0 0
    %1002 = vmatmul.mubr.bf16.gmra.mrb[0].mxu0 %v955
    %v1003 = vpop.f32.mrb[0].mxu0
    %v1004 = vadd.f32 0.0, %v1003
    %v1005 = vpop.f32.mrb[0].mxu0
    %v1006 = vadd.f32 0.0, %v1005
    %v1007 = vpop.f32.mrb[0].mxu0
    %v1008 = vpop.f32.mrb[0].mxu0
    %1009 = vdwg.mxu0
    %v1010 = vadd.f32 %v786, %v994
    %v1011 = vadd.f32 %v787, %v996
    %v1012 = vadd.f32 %v788, %v998
    %v1013 = vadd.f32 %v789, %v1000
    %v1014 = vadd.f32 %v790, %v1004
    %v1015 = vadd.f32 %v791, %v1006
    %s1016 = scalar_lea.vmem [#allocation2], 512
    %v1017 = vld [vmem:[%s1016] sm:$0xff]
    %v1018 = vld [vmem:[%s1016 + $0x8] sm:$0xff]
    %v1019 = vld [vmem:[%s1016 + $0x10] sm:$0xff]
    %v1020 = vld [vmem:[%s1016 + $0x18] sm:$0xff]
    %v1021 = vld [vmem:[%s1016 + $0x20] sm:$0xff]
    %v1022 = vld [vmem:[%s1016 + $0x28] sm:$0xff]
    %v1023 = vld [vmem:[%s1016 + $0x30] sm:$0xff]
    %v1024 = vld [vmem:[%s1016 + $0x38] sm:$0xff]
    %v1025 = vld [vmem:[%s1016 + $0x40] sm:$0xff]
    %v1026 = vld [vmem:[%s1016 + $0x48] sm:$0xff]
    %v1027 = vld [vmem:[%s1016 + $0x50] sm:$0xff]
    %v1028 = vld [vmem:[%s1016 + $0x58] sm:$0xff]
    %v1029 = vld [vmem:[%s1016 + $0x60] sm:$0xff]
    %v1030 = vld [vmem:[%s1016 + $0x68] sm:$0xff]
    %v1031 = vld [vmem:[%s1016 + $0x70] sm:$0xff]
    %v1032 = vld [vmem:[%s1016 + $0x78] sm:$0xff]
    %v1049 = vunpack.c.l.b16 %v1017
    %v1050 = vunpack.c.h.b16 %v1017
    %v1051 = vunpack.c.l.b16 %v1018
    %v1052 = vunpack.c.h.b16 %v1018
    %v1053 = vunpack.c.l.b16 %v1019
    %v1054 = vunpack.c.h.b16 %v1019
    %v1055 = vunpack.c.l.b16 %v1020
    %v1056 = vunpack.c.h.b16 %v1020
    %v1057 = vunpack.c.l.b16 %v1021
    %v1058 = vunpack.c.h.b16 %v1021
    %v1059 = vunpack.c.l.b16 %v1022
    %v1060 = vunpack.c.h.b16 %v1022
    %v1061 = vunpack.c.l.b16 %v1023
    %v1062 = vunpack.c.h.b16 %v1023
    %v1063 = vunpack.c.l.b16 %v1024
    %v1064 = vunpack.c.h.b16 %v1024
    %v1065 = vunpack.c.l.b16 %v1025
    %v1066 = vunpack.c.h.b16 %v1025
    %v1067 = vunpack.c.l.b16 %v1026
    %v1068 = vunpack.c.h.b16 %v1026
    %v1069 = vunpack.c.l.b16 %v1027
    %v1070 = vunpack.c.h.b16 %v1027
    %v1071 = vunpack.c.l.b16 %v1028
    %v1072 = vunpack.c.h.b16 %v1028
    %v1073 = vunpack.c.l.b16 %v1029
    %v1074 = vunpack.c.h.b16 %v1029
    %v1075 = vunpack.c.l.b16 %v1030
    %v1076 = vunpack.c.h.b16 %v1030
    %v1077 = vunpack.c.l.b16 %v1031
    %v1078 = vunpack.c.h.b16 %v1031
    %v1079 = vunpack.c.l.b16 %v1032
    %v1080 = vunpack.c.h.b16 %v1032
    %v1081 = vpack.c.b16 %v1051, %v1049
    %v1082 = vpack.c.b16 %v1052, %v1050
    %v1083 = vpack.c.b16 %v1055, %v1053
    %v1084 = vpack.c.b16 %v1056, %v1054
    %v1085 = vpack.c.b16 %v1059, %v1057
    %v1086 = vpack.c.b16 %v1060, %v1058
    %v1087 = vpack.c.b16 %v1063, %v1061
    %v1088 = vpack.c.b16 %v1064, %v1062
    %v1089 = vpack.c.b16 %v1067, %v1065
    %v1090 = vpack.c.b16 %v1068, %v1066
    %v1091 = vpack.c.b16 %v1071, %v1069
    %v1092 = vpack.c.b16 %v1072, %v1070
    %v1093 = vpack.c.b16 %v1075, %v1073
    %v1094 = vpack.c.b16 %v1076, %v1074
    %v1095 = vpack.c.b16 %v1079, %v1077
    %v1096 = vpack.c.b16 %v1080, %v1078
    %1113 = vmatprep.subr.bf16.mxu0 %v1082
    %1114 = vmatpush1.bf16.msra.mxu0 %v1081
    %1115 = vmatprep.subr.bf16.mxu0 %v1084
    %1116 = vmatpush1.bf16.msra.mxu0 %v1083
    %1117 = vmatprep.subr.bf16.mxu0 %v1086
    %1118 = vmatpush1.bf16.msra.mxu0 %v1085
    %1119 = vmatprep.subr.bf16.mxu0 %v1088
    %1120 = vmatpush1.bf16.msra.mxu0 %v1087
    %1121 = vmatprep.subr.bf16.mxu0 %v1090
    %1122 = vmatpush1.bf16.msra.mxu0 %v1089
    %1123 = vmatprep.subr.bf16.mxu0 %v1092
    %1124 = vmatpush1.bf16.msra.mxu0 %v1091
    %1125 = vmatprep.subr.bf16.mxu0 %v1094
    %1126 = vmatpush1.bf16.msra.mxu0 %v1093
    %1127 = vmatprep.subr.bf16.mxu0 %v1096
    %1128 = vmatpush1.bf16.msra.mxu0 %v1095
    %1129 = vmatprep.subr.bf16.mxu0 0
    %1130 = vmatpush1.bf16.msra.mxu0 0
    %1131 = vmatprep.subr.bf16.mxu0 0
    %1132 = vmatpush1.bf16.msra.mxu0 0
    %1133 = vmatprep.subr.bf16.mxu0 0
    %1134 = vmatpush1.bf16.msra.mxu0 0
    %1135 = vmatprep.subr.bf16.mxu0 0
    %1136 = vmatpush1.bf16.msra.mxu0 0
    %1137 = vmatprep.subr.bf16.mxu0 0
    %1138 = vmatpush1.bf16.msra.mxu0 0
    %1139 = vmatprep.subr.bf16.mxu0 0
    %1140 = vmatpush1.bf16.msra.mxu0 0
    %1141 = vmatprep.subr.bf16.mxu0 0
    %1142 = vmatpush1.bf16.msra.mxu0 0
    %1143 = vmatprep.subr.bf16.mxu0 0
    %1144 = vmatpush1.bf16.msra.mxu0 0
    %1145 = vmatprep.mubr.bf16.mxu0 0
    %1146 = vmatmul.mubr.bf16.gmra.mrb[0].mxu0 %v956
    %v1147 = vpop.f32.mrb[0].mxu0
    %v1148 = vadd.f32 0.0, %v1147
    %v1149 = vpop.f32.mrb[0].mxu0
    %v1150 = vadd.f32 0.0, %v1149
    %v1151 = vpop.f32.mrb[0].mxu0
    %v1152 = vadd.f32 0.0, %v1151
    %v1153 = vpop.f32.mrb[0].mxu0
    %v1154 = vadd.f32 0.0, %v1153
    %1155 = vmatprep.mubr.bf16.mxu0 0
    %1156 = vmatmul.mubr.bf16.gmra.mrb[0].mxu0 %v955
    %v1157 = vpop.f32.mrb[0].mxu0
    %v1158 = vadd.f32 0.0, %v1157
    %v1159 = vpop.f32.mrb[0].mxu0
    %v1160 = vadd.f32 0.0, %v1159
    %v1161 = vpop.f32.mrb[0].mxu0
    %v1162 = vpop.f32.mrb[0].mxu0
    %1163 = vdwg.mxu0
    %v1164 = vadd.f32 %v940, %v1148
    %v1165 = vadd.f32 %v941, %v1150
    %v1166 = vadd.f32 %v942, %v1152
    %v1167 = vadd.f32 %v943, %v1154
    %v1168 = vadd.f32 %v944, %v1158
    %v1169 = vadd.f32 %v945, %v1160
    %v1170 = vld [vmem:[%s0 + $0x18] sm:$0xf]
    %v1172 = vunpack.c.l.b16 %v1170
    %v1173 = vpack.c.b16 %v269, %v268
    %v1174 = vpack.c.b16 %v1172, %v1172
    %1177 = vmatprep.subr.bf16.mxu0 %v1082
    %1178 = vmatpush1.bf16.msra.mxu0 %v1081
    %1179 = vmatprep.subr.bf16.mxu0 %v1084
    %1180 = vmatpush1.bf16.msra.mxu0 %v1083
    %1181 = vmatprep.subr.bf16.mxu0 %v1086
    %1182 = vmatpush1.bf16.msra.mxu0 %v1085
    %1183 = vmatprep.subr.bf16.mxu0 %v1088
    %1184 = vmatpush1.bf16.msra.mxu0 %v1087
    %1185 = vmatprep.subr.bf16.mxu0 %v1090
    %1186 = vmatpush1.bf16.msra.mxu0 %v1089
    %1187 = vmatprep.subr.bf16.mxu0 %v1092
    %1188 = vmatpush1.bf16.msra.mxu0 %v1091
    %1189 = vmatprep.subr.bf16.mxu0 %v1094
    %1190 = vmatpush1.bf16.msra.mxu0 %v1093
    %1191 = vmatprep.subr.bf16.mxu0 %v1096
    %1192 = vmatpush1.bf16.msra.mxu0 %v1095
    %1193 = vmatprep.subr.bf16.mxu0 0
    %1194 = vmatpush1.bf16.msra.mxu0 0
    %1195 = vmatprep.subr.bf16.mxu0 0
    %1196 = vmatpush1.bf16.msra.mxu0 0
    %1197 = vmatprep.subr.bf16.mxu0 0
    %1198 = vmatpush1.bf16.msra.mxu0 0
    %1199 = vmatprep.subr.bf16.mxu0 0
    %1200 = vmatpush1.bf16.msra.mxu0 0
    %1201 = vmatprep.subr.bf16.mxu0 0
    %1202 = vmatpush1.bf16.msra.mxu0 0
    %1203 = vmatprep.subr.bf16.mxu0 0
    %1204 = vmatpush1.bf16.msra.mxu0 0
    %1205 = vmatprep.subr.bf16.mxu0 0
    %1206 = vmatpush1.bf16.msra.mxu0 0
    %1207 = vmatprep.subr.bf16.mxu0 0
    %1208 = vmatpush1.bf16.msra.mxu0 0
    %1209 = vmatprep.mubr.bf16.mxu0 0
    %1210 = vmatmul.mubr.bf16.gmra.mrb[0].mxu0 %v1173
    %v1211 = vpop.f32.mrb[0].mxu0
    %v1212 = vadd.f32 0.0, %v1211
    %v1213 = vpop.f32.mrb[0].mxu0
    %v1214 = vadd.f32 0.0, %v1213
    %v1215 = vpop.f32.mrb[0].mxu0
    %v1216 = vadd.f32 0.0, %v1215
    %v1217 = vpop.f32.mrb[0].mxu0
    %v1218 = vadd.f32 0.0, %v1217
    %1219 = vmatprep.mubr.bf16.mxu0 0
    %1220 = vmatmul.mubr.bf16.gmra.mrb[0].mxu0 %v1174
    %v1221 = vpop.f32.mrb[0].mxu0
    %v1222 = vadd.f32 0.0, %v1221
    %v1223 = vpop.f32.mrb[0].mxu0
    %v1224 = vadd.f32 0.0, %v1223
    %v1225 = vpop.f32.mrb[0].mxu0
    %v1226 = vpop.f32.mrb[0].mxu0
    %1227 = vdwg.mxu0
    %v1228 = vadd.f32 %v1010, %v1212
    %v1229 = vadd.f32 %v1011, %v1214
    %v1230 = vadd.f32 %v1012, %v1216
    %v1231 = vadd.f32 %v1013, %v1218
    %v1232 = vadd.f32 %v1014, %v1222
    %v1233 = vadd.f32 %v1015, %v1224
    %v1234 = vmax.f32 %v1164, %v1228
    %v1235 = vmax.f32 %v1165, %v1229
    %v1236 = vmax.f32 %v1166, %v1230
    %v1237 = vmax.f32 %v1167, %v1231
    %v1238 = vmax.f32 %v1168, %v1232
    %v1239 = vmax.f32 %v1169, %v1233
    %v1240 = vmax.f32 %v1234, %v1235
    %v1241 = vmax.f32 %v1236, %v1237
    %v1242 = vmax.f32 %v1238, %v1239
    %v1243 = vmax.f32 %v1240, 0.0
    %v1244 = vmax.f32 %v1241, 0.0
    %v1245 = vmax.f32 %v1242, 0.0
    %v1246 = vpack.c.bf16 %v1244, %v1243
    %v1247 = vpack.c.bf16 %v1245, %v1245
    %v1248 = vld [vmem:[%s4] sm:$0x3]
    %v1250 = vlaneseq
    %v1251 = vshrl.u32 %v1250, 7
    %v1252 = vsub.s32 0, %v1251
    %v1253 = vrot.slane %v1248, %v1252
    %v1254 = vlaneseq
    %v1255 = vshrl.u32 %v1254, 7
    %v1256 = vsub.s32 1, %v1255
    %v1257 = vrot.slane %v1248, %v1256
    %v1260 = vld [vmem:[#allocation5] sm:$0xff]
    %v1261 = vld [vmem:[#allocation5 + $0x8] sm:$0xff]
    %v1262 = vld [vmem:[#allocation5 + $0x10] sm:$0xff]
    %v1263 = vld [vmem:[#allocation5 + $0x18] sm:$0xff]
    %v1264 = vld [vmem:[#allocation5 + $0x20] sm:$0xff]
    %v1265 = vld [vmem:[#allocation5 + $0x28] sm:$0xff]
    %v1266 = vld [vmem:[#allocation5 + $0x30] sm:$0xff]
    %v1267 = vld [vmem:[#allocation5 + $0x38] sm:$0xff]
    %v1268 = vld [vmem:[#allocation5 + $0x40] sm:$0xff]
    %v1269 = vld [vmem:[#allocation5 + $0x48] sm:$0xff]
    %v1270 = vld [vmem:[#allocation5 + $0x50] sm:$0xff]
    %v1271 = vld [vmem:[#allocation5 + $0x58] sm:$0xff]
    %v1272 = vld [vmem:[#allocation5 + $0x60] sm:$0xff]
    %v1273 = vld [vmem:[#allocation5 + $0x68] sm:$0xff]
    %v1274 = vld [vmem:[#allocation5 + $0x70] sm:$0xff]
    %v1275 = vld [vmem:[#allocation5 + $0x78] sm:$0xff]
    %v1292 = vunpack.c.l.b16 %v1260
    %v1293 = vunpack.c.h.b16 %v1260
    %v1294 = vunpack.c.l.b16 %v1261
    %v1295 = vunpack.c.h.b16 %v1261
    %v1296 = vunpack.c.l.b16 %v1262
    %v1297 = vunpack.c.h.b16 %v1262
    %v1298 = vunpack.c.l.b16 %v1263
    %v1299 = vunpack.c.h.b16 %v1263
    %v1300 = vunpack.c.l.b16 %v1264
    %v1301 = vunpack.c.h.b16 %v1264
    %v1302 = vunpack.c.l.b16 %v1265
    %v1303 = vunpack.c.h.b16 %v1265
    %v1304 = vunpack.c.l.b16 %v1266
    %v1305 = vunpack.c.h.b16 %v1266
    %v1306 = vunpack.c.l.b16 %v1267
    %v1307 = vunpack.c.h.b16 %v1267
    %v1308 = vunpack.c.l.b16 %v1268
    %v1309 = vunpack.c.h.b16 %v1268
    %v1310 = vunpack.c.l.b16 %v1269
    %v1311 = vunpack.c.h.b16 %v1269
    %v1312 = vunpack.c.l.b16 %v1270
    %v1313 = vunpack.c.h.b16 %v1270
    %v1314 = vunpack.c.l.b16 %v1271
    %v1315 = vunpack.c.h.b16 %v1271
    %v1316 = vunpack.c.l.b16 %v1272
    %v1317 = vunpack.c.h.b16 %v1272
    %v1318 = vunpack.c.l.b16 %v1273
    %v1319 = vunpack.c.h.b16 %v1273
    %v1320 = vunpack.c.l.b16 %v1274
    %v1321 = vunpack.c.h.b16 %v1274
    %v1322 = vunpack.c.l.b16 %v1275
    %v1323 = vunpack.c.h.b16 %v1275
    %v1324 = vpack.c.b16 %v1294, %v1292
    %v1325 = vpack.c.b16 %v1295, %v1293
    %v1326 = vpack.c.b16 %v1298, %v1296
    %v1327 = vpack.c.b16 %v1299, %v1297
    %v1328 = vpack.c.b16 %v1302, %v1300
    %v1329 = vpack.c.b16 %v1303, %v1301
    %v1330 = vpack.c.b16 %v1306, %v1304
    %v1331 = vpack.c.b16 %v1307, %v1305
    %v1332 = vpack.c.b16 %v1310, %v1308
    %v1333 = vpack.c.b16 %v1311, %v1309
    %v1334 = vpack.c.b16 %v1314, %v1312
    %v1335 = vpack.c.b16 %v1315, %v1313
    %v1336 = vpack.c.b16 %v1318, %v1316
    %v1337 = vpack.c.b16 %v1319, %v1317
    %v1338 = vpack.c.b16 %v1322, %v1320
    %v1339 = vpack.c.b16 %v1323, %v1321
    %1356 = vmatprep.subr.bf16.mxu0 %v1325
    %1357 = vmatpush1.bf16.msra.mxu0 %v1324
    %1358 = vmatprep.subr.bf16.mxu0 %v1327
    %1359 = vmatpush1.bf16.msra.mxu0 %v1326
    %1360 = vmatprep.subr.bf16.mxu0 %v1329
    %1361 = vmatpush1.bf16.msra.mxu0 %v1328
    %1362 = vmatprep.subr.bf16.mxu0 %v1331
    %1363 = vmatpush1.bf16.msra.mxu0 %v1330
    %1364 = vmatprep.subr.bf16.mxu0 %v1333
    %1365 = vmatpush1.bf16.msra.mxu0 %v1332
    %1366 = vmatprep.subr.bf16.mxu0 %v1335
    %1367 = vmatpush1.bf16.msra.mxu0 %v1334
    %1368 = vmatprep.subr.bf16.mxu0 %v1337
    %1369 = vmatpush1.bf16.msra.mxu0 %v1336
    %1370 = vmatprep.subr.bf16.mxu0 %v1339
    %1371 = vmatpush1.bf16.msra.mxu0 %v1338
    %1372 = vmatprep.subr.bf16.mxu0 0
    %1373 = vmatpush1.bf16.msra.mxu0 0
    %1374 = vmatprep.subr.bf16.mxu0 0
    %1375 = vmatpush1.bf16.msra.mxu0 0
    %1376 = vmatprep.subr.bf16.mxu0 0
    %1377 = vmatpush1.bf16.msra.mxu0 0
    %1378 = vmatprep.subr.bf16.mxu0 0
    %1379 = vmatpush1.bf16.msra.mxu0 0
    %1380 = vmatprep.subr.bf16.mxu0 0
    %1381 = vmatpush1.bf16.msra.mxu0 0
    %1382 = vmatprep.subr.bf16.mxu0 0
    %1383 = vmatpush1.bf16.msra.mxu0 0
    %1384 = vmatprep.subr.bf16.mxu0 0
    %1385 = vmatpush1.bf16.msra.mxu0 0
    %1386 = vmatprep.subr.bf16.mxu0 0
    %1387 = vmatpush1.bf16.msra.mxu0 0
    %1388 = vmatprep.mubr.bf16.mxu0 0
    %1389 = vmatmul.mubr.bf16.gmra.mrb[0].mxu0 %v1246
    %v1390 = vpop.f32.mrb[0].mxu0
    %v1391 = vadd.f32 0.0, %v1390
    %v1392 = vpop.f32.mrb[0].mxu0
    %v1393 = vadd.f32 0.0, %v1392
    %v1394 = vpop.f32.mrb[0].mxu0
    %v1395 = vadd.f32 0.0, %v1394
    %v1396 = vpop.f32.mrb[0].mxu0
    %v1397 = vadd.f32 0.0, %v1396
    %1398 = vdwg.mxu0
    %v1399 = vadd.f32 %v1253, %v1391
    %v1400 = vadd.f32 %v1257, %v1393
    %v1401 = vadd.f32 %v1253, %v1395
    %v1402 = vadd.f32 %v1257, %v1397
    %s1403 = scalar_lea.vmem [#allocation5], 128
    %v1404 = vld [vmem:[%s1403] sm:$0xff]
    %v1405 = vld [vmem:[%s1403 + $0x8] sm:$0xff]
    %v1406 = vld [vmem:[%s1403 + $0x10] sm:$0xff]
    %v1407 = vld [vmem:[%s1403 + $0x18] sm:$0xff]
    %v1408 = vld [vmem:[%s1403 + $0x20] sm:$0xff]
    %v1409 = vld [vmem:[%s1403 + $0x28] sm:$0xff]
    %v1410 = vld [vmem:[%s1403 + $0x30] sm:$0xff]
    %v1411 = vld [vmem:[%s1403 + $0x38] sm:$0xff]
    %v1412 = vld [vmem:[%s1403 + $0x40] sm:$0xff]
    %v1413 = vld [vmem:[%s1403 + $0x48] sm:$0xff]
    %v1414 = vld [vmem:[%s1403 + $0x50] sm:$0xff]
    %v1415 = vld [vmem:[%s1403 + $0x58] sm:$0xff]
    %v1416 = vld [vmem:[%s1403 + $0x60] sm:$0xff]
    %v1417 = vld [vmem:[%s1403 + $0x68] sm:$0xff]
    %v1418 = vld [vmem:[%s1403 + $0x70] sm:$0xff]
    %v1419 = vld [vmem:[%s1403 + $0x78] sm:$0xff]
    %v1422 = vrot.slane %v1246, 1
    %v1423 = vrot.slane %v1247, 1
    %v1424 = vsel %vm504, %v1422, %v1423
    %v1442 = vunpack.c.l.b16 %v1404
    %v1443 = vunpack.c.h.b16 %v1404
    %v1444 = vunpack.c.l.b16 %v1405
    %v1445 = vunpack.c.h.b16 %v1405
    %v1446 = vunpack.c.l.b16 %v1406
    %v1447 = vunpack.c.h.b16 %v1406
    %v1448 = vunpack.c.l.b16 %v1407
    %v1449 = vunpack.c.h.b16 %v1407
    %v1450 = vunpack.c.l.b16 %v1408
    %v1451 = vunpack.c.h.b16 %v1408
    %v1452 = vunpack.c.l.b16 %v1409
    %v1453 = vunpack.c.h.b16 %v1409
    %v1454 = vunpack.c.l.b16 %v1410
    %v1455 = vunpack.c.h.b16 %v1410
    %v1456 = vunpack.c.l.b16 %v1411
    %v1457 = vunpack.c.h.b16 %v1411
    %v1458 = vunpack.c.l.b16 %v1412
    %v1459 = vunpack.c.h.b16 %v1412
    %v1460 = vunpack.c.l.b16 %v1413
    %v1461 = vunpack.c.h.b16 %v1413
    %v1462 = vunpack.c.l.b16 %v1414
    %v1463 = vunpack.c.h.b16 %v1414
    %v1464 = vunpack.c.l.b16 %v1415
    %v1465 = vunpack.c.h.b16 %v1415
    %v1466 = vunpack.c.l.b16 %v1416
    %v1467 = vunpack.c.h.b16 %v1416
    %v1468 = vunpack.c.l.b16 %v1417
    %v1469 = vunpack.c.h.b16 %v1417
    %v1470 = vunpack.c.l.b16 %v1418
    %v1471 = vunpack.c.h.b16 %v1418
    %v1472 = vunpack.c.l.b16 %v1419
    %v1473 = vunpack.c.h.b16 %v1419
    %v1474 = vpack.c.b16 %v1444, %v1442
    %v1475 = vpack.c.b16 %v1445, %v1443
    %v1476 = vpack.c.b16 %v1448, %v1446
    %v1477 = vpack.c.b16 %v1449, %v1447
    %v1478 = vpack.c.b16 %v1452, %v1450
    %v1479 = vpack.c.b16 %v1453, %v1451
    %v1480 = vpack.c.b16 %v1456, %v1454
    %v1481 = vpack.c.b16 %v1457, %v1455
    %v1482 = vpack.c.b16 %v1460, %v1458
    %v1483 = vpack.c.b16 %v1461, %v1459
    %v1484 = vpack.c.b16 %v1464, %v1462
    %v1485 = vpack.c.b16 %v1465, %v1463
    %v1486 = vpack.c.b16 %v1468, %v1466
    %v1487 = vpack.c.b16 %v1469, %v1467
    %v1488 = vpack.c.b16 %v1472, %v1470
    %v1489 = vpack.c.b16 %v1473, %v1471
    %1506 = vmatprep.subr.bf16.mxu0 %v1475
    %1507 = vmatpush1.bf16.msra.mxu0 %v1474
    %1508 = vmatprep.subr.bf16.mxu0 %v1477
    %1509 = vmatpush1.bf16.msra.mxu0 %v1476
    %1510 = vmatprep.subr.bf16.mxu0 %v1479
    %1511 = vmatpush1.bf16.msra.mxu0 %v1478
    %1512 = vmatprep.subr.bf16.mxu0 %v1481
    %1513 = vmatpush1.bf16.msra.mxu0 %v1480
    %1514 = vmatprep.subr.bf16.mxu0 %v1483
    %1515 = vmatpush1.bf16.msra.mxu0 %v1482
    %1516 = vmatprep.subr.bf16.mxu0 %v1485
    %1517 = vmatpush1.bf16.msra.mxu0 %v1484
    %1518 = vmatprep.subr.bf16.mxu0 %v1487
    %1519 = vmatpush1.bf16.msra.mxu0 %v1486
    %1520 = vmatprep.subr.bf16.mxu0 %v1489
    %1521 = vmatpush1.bf16.msra.mxu0 %v1488
    %1522 = vmatprep.subr.bf16.mxu0 0
    %1523 = vmatpush1.bf16.msra.mxu0 0
    %1524 = vmatprep.subr.bf16.mxu0 0
    %1525 = vmatpush1.bf16.msra.mxu0 0
    %1526 = vmatprep.subr.bf16.mxu0 0
    %1527 = vmatpush1.bf16.msra.mxu0 0
    %1528 = vmatprep.subr.bf16.mxu0 0
    %1529 = vmatpush1.bf16.msra.mxu0 0
    %1530 = vmatprep.subr.bf16.mxu0 0
    %1531 = vmatpush1.bf16.msra.mxu0 0
    %1532 = vmatprep.subr.bf16.mxu0 0
    %1533 = vmatpush1.bf16.msra.mxu0 0
    %1534 = vmatprep.subr.bf16.mxu0 0
    %1535 = vmatpush1.bf16.msra.mxu0 0
    %1536 = vmatprep.subr.bf16.mxu0 0
    %1537 = vmatpush1.bf16.msra.mxu0 0
    %1538 = vmatprep.mubr.bf16.mxu0 0
    %1539 = vmatmul.mubr.bf16.gmra.mrb[0].mxu0 %v1424
    %v1540 = vpop.f32.mrb[0].mxu0
    %v1541 = vadd.f32 0.0, %v1540
    %v1542 = vpop.f32.mrb[0].mxu0
    %v1543 = vadd.f32 0.0, %v1542
    %v1544 = vpop.f32.mrb[0].mxu0
    %v1545 = vadd.f32 0.0, %v1544
    %v1546 = vpop.f32.mrb[0].mxu0
    %v1547 = vadd.f32 0.0, %v1546
    %1548 = vdwg.mxu0
    %v1549 = vadd.f32 %v1399, %v1541
    %v1550 = vadd.f32 %v1400, %v1543
    %v1551 = vadd.f32 %v1401, %v1545
    %v1552 = vadd.f32 %v1402, %v1547
    %s1553 = scalar_lea.vmem [#allocation5], 256
    %v1554 = vld [vmem:[%s1553] sm:$0xff]
    %v1555 = vld [vmem:[%s1553 + $0x8] sm:$0xff]
    %v1556 = vld [vmem:[%s1553 + $0x10] sm:$0xff]
    %v1557 = vld [vmem:[%s1553 + $0x18] sm:$0xff]
    %v1558 = vld [vmem:[%s1553 + $0x20] sm:$0xff]
    %v1559 = vld [vmem:[%s1553 + $0x28] sm:$0xff]
    %v1560 = vld [vmem:[%s1553 + $0x30] sm:$0xff]
    %v1561 = vld [vmem:[%s1553 + $0x38] sm:$0xff]
    %v1562 = vld [vmem:[%s1553 + $0x40] sm:$0xff]
    %v1563 = vld [vmem:[%s1553 + $0x48] sm:$0xff]
    %v1564 = vld [vmem:[%s1553 + $0x50] sm:$0xff]
    %v1565 = vld [vmem:[%s1553 + $0x58] sm:$0xff]
    %v1566 = vld [vmem:[%s1553 + $0x60] sm:$0xff]
    %v1567 = vld [vmem:[%s1553 + $0x68] sm:$0xff]
    %v1568 = vld [vmem:[%s1553 + $0x70] sm:$0xff]
    %v1569 = vld [vmem:[%s1553 + $0x78] sm:$0xff]
    %v1570 = vrot.slane %v1246, 2
    %v1571 = vrot.slane %v1247, 2
    %v1572 = vsel %vm273, %v1570, %v1571
    %v1590 = vunpack.c.l.b16 %v1554
    %v1591 = vunpack.c.h.b16 %v1554
    %v1592 = vunpack.c.l.b16 %v1555
    %v1593 = vunpack.c.h.b16 %v1555
    %v1594 = vunpack.c.l.b16 %v1556
    %v1595 = vunpack.c.h.b16 %v1556
    %v1596 = vunpack.c.l.b16 %v1557
    %v1597 = vunpack.c.h.b16 %v1557
    %v1598 = vunpack.c.l.b16 %v1558
    %v1599 = vunpack.c.h.b16 %v1558
    %v1600 = vunpack.c.l.b16 %v1559
    %v1601 = vunpack.c.h.b16 %v1559
    %v1602 = vunpack.c.l.b16 %v1560
    %v1603 = vunpack.c.h.b16 %v1560
    %v1604 = vunpack.c.l.b16 %v1561
    %v1605 = vunpack.c.h.b16 %v1561
    %v1606 = vunpack.c.l.b16 %v1562
    %v1607 = vunpack.c.h.b16 %v1562
    %v1608 = vunpack.c.l.b16 %v1563
    %v1609 = vunpack.c.h.b16 %v1563
    %v1610 = vunpack.c.l.b16 %v1564
    %v1611 = vunpack.c.h.b16 %v1564
    %v1612 = vunpack.c.l.b16 %v1565
    %v1613 = vunpack.c.h.b16 %v1565
    %v1614 = vunpack.c.l.b16 %v1566
    %v1615 = vunpack.c.h.b16 %v1566
    %v1616 = vunpack.c.l.b16 %v1567
    %v1617 = vunpack.c.h.b16 %v1567
    %v1618 = vunpack.c.l.b16 %v1568
    %v1619 = vunpack.c.h.b16 %v1568
    %v1620 = vunpack.c.l.b16 %v1569
    %v1621 = vunpack.c.h.b16 %v1569
    %v1622 = vpack.c.b16 %v1592, %v1590
    %v1623 = vpack.c.b16 %v1593, %v1591
    %v1624 = vpack.c.b16 %v1596, %v1594
    %v1625 = vpack.c.b16 %v1597, %v1595
    %v1626 = vpack.c.b16 %v1600, %v1598
    %v1627 = vpack.c.b16 %v1601, %v1599
    %v1628 = vpack.c.b16 %v1604, %v1602
    %v1629 = vpack.c.b16 %v1605, %v1603
    %v1630 = vpack.c.b16 %v1608, %v1606
    %v1631 = vpack.c.b16 %v1609, %v1607
    %v1632 = vpack.c.b16 %v1612, %v1610
    %v1633 = vpack.c.b16 %v1613, %v1611
    %v1634 = vpack.c.b16 %v1616, %v1614
    %v1635 = vpack.c.b16 %v1617, %v1615
    %v1636 = vpack.c.b16 %v1620, %v1618
    %v1637 = vpack.c.b16 %v1621, %v1619
    %1654 = vmatprep.subr.bf16.mxu0 %v1623
    %1655 = vmatpush1.bf16.msra.mxu0 %v1622
    %1656 = vmatprep.subr.bf16.mxu0 %v1625
    %1657 = vmatpush1.bf16.msra.mxu0 %v1624
    %1658 = vmatprep.subr.bf16.mxu0 %v1627
    %1659 = vmatpush1.bf16.msra.mxu0 %v1626
    %1660 = vmatprep.subr.bf16.mxu0 %v1629
    %1661 = vmatpush1.bf16.msra.mxu0 %v1628
    %1662 = vmatprep.subr.bf16.mxu0 %v1631
    %1663 = vmatpush1.bf16.msra.mxu0 %v1630
    %1664 = vmatprep.subr.bf16.mxu0 %v1633
    %1665 = vmatpush1.bf16.msra.mxu0 %v1632
    %1666 = vmatprep.subr.bf16.mxu0 %v1635
    %1667 = vmatpush1.bf16.msra.mxu0 %v1634
    %1668 = vmatprep.subr.bf16.mxu0 %v1637
    %1669 = vmatpush1.bf16.msra.mxu0 %v1636
    %1670 = vmatprep.subr.bf16.mxu0 0
    %1671 = vmatpush1.bf16.msra.mxu0 0
    %1672 = vmatprep.subr.bf16.mxu0 0
    %1673 = vmatpush1.bf16.msra.mxu0 0
    %1674 = vmatprep.subr.bf16.mxu0 0
    %1675 = vmatpush1.bf16.msra.mxu0 0
    %1676 = vmatprep.subr.bf16.mxu0 0
    %1677 = vmatpush1.bf16.msra.mxu0 0
    %1678 = vmatprep.subr.bf16.mxu0 0
    %1679 = vmatpush1.bf16.msra.mxu0 0
    %1680 = vmatprep.subr.bf16.mxu0 0
    %1681 = vmatpush1.bf16.msra.mxu0 0
    %1682 = vmatprep.subr.bf16.mxu0 0
    %1683 = vmatpush1.bf16.msra.mxu0 0
    %1684 = vmatprep.subr.bf16.mxu0 0
    %1685 = vmatpush1.bf16.msra.mxu0 0
    %1686 = vmatprep.mubr.bf16.mxu0 0
    %1687 = vmatmul.mubr.bf16.gmra.mrb[0].mxu0 %v1572
    %v1688 = vpop.f32.mrb[0].mxu0
    %v1689 = vadd.f32 0.0, %v1688
    %v1690 = vpop.f32.mrb[0].mxu0
    %v1691 = vadd.f32 0.0, %v1690
    %v1692 = vpop.f32.mrb[0].mxu0
    %v1693 = vadd.f32 0.0, %v1692
    %v1694 = vpop.f32.mrb[0].mxu0
    %v1695 = vadd.f32 0.0, %v1694
    %1696 = vdwg.mxu0
    %v1697 = vadd.f32 %v1549, %v1689
    %v1698 = vadd.f32 %v1550, %v1691
    %v1699 = vadd.f32 %v1551, %v1693
    %v1700 = vadd.f32 %v1552, %v1695
    %s1701 = scalar_lea.vmem [#allocation5], 384
    %v1702 = vld [vmem:[%s1701] sm:$0xff]
    %v1703 = vld [vmem:[%s1701 + $0x8] sm:$0xff]
    %v1704 = vld [vmem:[%s1701 + $0x10] sm:$0xff]
    %v1705 = vld [vmem:[%s1701 + $0x18] sm:$0xff]
    %v1706 = vld [vmem:[%s1701 + $0x20] sm:$0xff]
    %v1707 = vld [vmem:[%s1701 + $0x28] sm:$0xff]
    %v1708 = vld [vmem:[%s1701 + $0x30] sm:$0xff]
    %v1709 = vld [vmem:[%s1701 + $0x38] sm:$0xff]
    %v1710 = vld [vmem:[%s1701 + $0x40] sm:$0xff]
    %v1711 = vld [vmem:[%s1701 + $0x48] sm:$0xff]
    %v1712 = vld [vmem:[%s1701 + $0x50] sm:$0xff]
    %v1713 = vld [vmem:[%s1701 + $0x58] sm:$0xff]
    %v1714 = vld [vmem:[%s1701 + $0x60] sm:$0xff]
    %v1715 = vld [vmem:[%s1701 + $0x68] sm:$0xff]
    %v1716 = vld [vmem:[%s1701 + $0x70] sm:$0xff]
    %v1717 = vld [vmem:[%s1701 + $0x78] sm:$0xff]
    %v1718 = vrot.slane %v1246, 3
    %v1719 = vrot.slane %v1247, 3
    %v1720 = vsel %vm729, %v1718, %v1719
    %v1738 = vunpack.c.l.b16 %v1702
    %v1739 = vunpack.c.h.b16 %v1702
    %v1740 = vunpack.c.l.b16 %v1703
    %v1741 = vunpack.c.h.b16 %v1703
    %v1742 = vunpack.c.l.b16 %v1704
    %v1743 = vunpack.c.h.b16 %v1704
    %v1744 = vunpack.c.l.b16 %v1705
    %v1745 = vunpack.c.h.b16 %v1705
    %v1746 = vunpack.c.l.b16 %v1706
    %v1747 = vunpack.c.h.b16 %v1706
    %v1748 = vunpack.c.l.b16 %v1707
    %v1749 = vunpack.c.h.b16 %v1707
    %v1750 = vunpack.c.l.b16 %v1708
    %v1751 = vunpack.c.h.b16 %v1708
    %v1752 = vunpack.c.l.b16 %v1709
    %v1753 = vunpack.c.h.b16 %v1709
    %v1754 = vunpack.c.l.b16 %v1710
    %v1755 = vunpack.c.h.b16 %v1710
    %v1756 = vunpack.c.l.b16 %v1711
    %v1757 = vunpack.c.h.b16 %v1711
    %v1758 = vunpack.c.l.b16 %v1712
    %v1759 = vunpack.c.h.b16 %v1712
    %v1760 = vunpack.c.l.b16 %v1713
    %v1761 = vunpack.c.h.b16 %v1713
    %v1762 = vunpack.c.l.b16 %v1714
    %v1763 = vunpack.c.h.b16 %v1714
    %v1764 = vunpack.c.l.b16 %v1715
    %v1765 = vunpack.c.h.b16 %v1715
    %v1766 = vunpack.c.l.b16 %v1716
    %v1767 = vunpack.c.h.b16 %v1716
    %v1768 = vunpack.c.l.b16 %v1717
    %v1769 = vunpack.c.h.b16 %v1717
    %v1770 = vpack.c.b16 %v1740, %v1738
    %v1771 = vpack.c.b16 %v1741, %v1739
    %v1772 = vpack.c.b16 %v1744, %v1742
    %v1773 = vpack.c.b16 %v1745, %v1743
    %v1774 = vpack.c.b16 %v1748, %v1746
    %v1775 = vpack.c.b16 %v1749, %v1747
    %v1776 = vpack.c.b16 %v1752, %v1750
    %v1777 = vpack.c.b16 %v1753, %v1751
    %v1778 = vpack.c.b16 %v1756, %v1754
    %v1779 = vpack.c.b16 %v1757, %v1755
    %v1780 = vpack.c.b16 %v1760, %v1758
    %v1781 = vpack.c.b16 %v1761, %v1759
    %v1782 = vpack.c.b16 %v1764, %v1762
    %v1783 = vpack.c.b16 %v1765, %v1763
    %v1784 = vpack.c.b16 %v1768, %v1766
    %v1785 = vpack.c.b16 %v1769, %v1767
    %1802 = vmatprep.subr.bf16.mxu0 %v1771
    %1803 = vmatpush1.bf16.msra.mxu0 %v1770
    %1804 = vmatprep.subr.bf16.mxu0 %v1773
    %1805 = vmatpush1.bf16.msra.mxu0 %v1772
    %1806 = vmatprep.subr.bf16.mxu0 %v1775
    %1807 = vmatpush1.bf16.msra.mxu0 %v1774
    %1808 = vmatprep.subr.bf16.mxu0 %v1777
    %1809 = vmatpush1.bf16.msra.mxu0 %v1776
    %1810 = vmatprep.subr.bf16.mxu0 %v1779
    %1811 = vmatpush1.bf16.msra.mxu0 %v1778
    %1812 = vmatprep.subr.bf16.mxu0 %v1781
    %1813 = vmatpush1.bf16.msra.mxu0 %v1780
    %1814 = vmatprep.subr.bf16.mxu0 %v1783
    %1815 = vmatpush1.bf16.msra.mxu0 %v1782
    %1816 = vmatprep.subr.bf16.mxu0 %v1785
    %1817 = vmatpush1.bf16.msra.mxu0 %v1784
    %1818 = vmatprep.subr.bf16.mxu0 0
    %1819 = vmatpush1.bf16.msra.mxu0 0
    %1820 = vmatprep.subr.bf16.mxu0 0
    %1821 = vmatpush1.bf16.msra.mxu0 0
    %1822 = vmatprep.subr.bf16.mxu0 0
    %1823 = vmatpush1.bf16.msra.mxu0 0
    %1824 = vmatprep.subr.bf16.mxu0 0
    %1825 = vmatpush1.bf16.msra.mxu0 0
    %1826 = vmatprep.subr.bf16.mxu0 0
    %1827 = vmatpush1.bf16.msra.mxu0 0
    %1828 = vmatprep.subr.bf16.mxu0 0
    %1829 = vmatpush1.bf16.msra.mxu0 0
    %1830 = vmatprep.subr.bf16.mxu0 0
    %1831 = vmatpush1.bf16.msra.mxu0 0
    %1832 = vmatprep.subr.bf16.mxu0 0
    %1833 = vmatpush1.bf16.msra.mxu0 0
    %1834 = vmatprep.mubr.bf16.mxu0 0
    %1835 = vmatmul.mubr.bf16.gmra.mrb[0].mxu0 %v1720
    %v1836 = vpop.f32.mrb[0].mxu0
    %v1837 = vadd.f32 0.0, %v1836
    %v1838 = vpop.f32.mrb[0].mxu0
    %v1839 = vadd.f32 0.0, %v1838
    %v1840 = vpop.f32.mrb[0].mxu0
    %v1841 = vadd.f32 0.0, %v1840
    %v1842 = vpop.f32.mrb[0].mxu0
    %v1843 = vadd.f32 0.0, %v1842
    %1844 = vdwg.mxu0
    %v1845 = vadd.f32 %v1697, %v1837
    %v1846 = vadd.f32 %v1698, %v1839
    %v1847 = vadd.f32 %v1699, %v1841
    %v1848 = vadd.f32 %v1700, %v1843
    %s1849 = scalar_lea.vmem [#allocation5], 512
    %v1850 = vld [vmem:[%s1849] sm:$0xff]
    %v1851 = vld [vmem:[%s1849 + $0x8] sm:$0xff]
    %v1852 = vld [vmem:[%s1849 + $0x10] sm:$0xff]
    %v1853 = vld [vmem:[%s1849 + $0x18] sm:$0xff]
    %v1854 = vld [vmem:[%s1849 + $0x20] sm:$0xff]
    %v1855 = vld [vmem:[%s1849 + $0x28] sm:$0xff]
    %v1856 = vld [vmem:[%s1849 + $0x30] sm:$0xff]
    %v1857 = vld [vmem:[%s1849 + $0x38] sm:$0xff]
    %v1858 = vld [vmem:[%s1849 + $0x40] sm:$0xff]
    %v1859 = vld [vmem:[%s1849 + $0x48] sm:$0xff]
    %v1860 = vld [vmem:[%s1849 + $0x50] sm:$0xff]
    %v1861 = vld [vmem:[%s1849 + $0x58] sm:$0xff]
    %v1862 = vld [vmem:[%s1849 + $0x60] sm:$0xff]
    %v1863 = vld [vmem:[%s1849 + $0x68] sm:$0xff]
    %v1864 = vld [vmem:[%s1849 + $0x70] sm:$0xff]
    %v1865 = vld [vmem:[%s1849 + $0x78] sm:$0xff]
    %vm1866 = vcmask 1043456
    %v1867 = vrot.slane %v1246, 4
    %v1868 = vrot.slane %v1247, 4
    %v1869 = vsel %vm1866, %v1867, %v1868
    %v1887 = vunpack.c.l.b16 %v1850
    %v1888 = vunpack.c.h.b16 %v1850
    %v1889 = vunpack.c.l.b16 %v1851
    %v1890 = vunpack.c.h.b16 %v1851
    %v1891 = vunpack.c.l.b16 %v1852
    %v1892 = vunpack.c.h.b16 %v1852
    %v1893 = vunpack.c.l.b16 %v1853
    %v1894 = vunpack.c.h.b16 %v1853
    %v1895 = vunpack.c.l.b16 %v1854
    %v1896 = vunpack.c.h.b16 %v1854
    %v1897 = vunpack.c.l.b16 %v1855
    %v1898 = vunpack.c.h.b16 %v1855
    %v1899 = vunpack.c.l.b16 %v1856
    %v1900 = vunpack.c.h.b16 %v1856
    %v1901 = vunpack.c.l.b16 %v1857
    %v1902 = vunpack.c.h.b16 %v1857
    %v1903 = vunpack.c.l.b16 %v1858
    %v1904 = vunpack.c.h.b16 %v1858
    %v1905 = vunpack.c.l.b16 %v1859
    %v1906 = vunpack.c.h.b16 %v1859
    %v1907 = vunpack.c.l.b16 %v1860
    %v1908 = vunpack.c.h.b16 %v1860
    %v1909 = vunpack.c.l.b16 %v1861
    %v1910 = vunpack.c.h.b16 %v1861
    %v1911 = vunpack.c.l.b16 %v1862
    %v1912 = vunpack.c.h.b16 %v1862
    %v1913 = vunpack.c.l.b16 %v1863
    %v1914 = vunpack.c.h.b16 %v1863
    %v1915 = vunpack.c.l.b16 %v1864
    %v1916 = vunpack.c.h.b16 %v1864
    %v1917 = vunpack.c.l.b16 %v1865
    %v1918 = vunpack.c.h.b16 %v1865
    %v1919 = vpack.c.b16 %v1889, %v1887
    %v1920 = vpack.c.b16 %v1890, %v1888
    %v1921 = vpack.c.b16 %v1893, %v1891
    %v1922 = vpack.c.b16 %v1894, %v1892
    %v1923 = vpack.c.b16 %v1897, %v1895
    %v1924 = vpack.c.b16 %v1898, %v1896
    %v1925 = vpack.c.b16 %v1901, %v1899
    %v1926 = vpack.c.b16 %v1902, %v1900
    %v1927 = vpack.c.b16 %v1905, %v1903
    %v1928 = vpack.c.b16 %v1906, %v1904
    %v1929 = vpack.c.b16 %v1909, %v1907
    %v1930 = vpack.c.b16 %v1910, %v1908
    %v1931 = vpack.c.b16 %v1913, %v1911
    %v1932 = vpack.c.b16 %v1914, %v1912
    %v1933 = vpack.c.b16 %v1917, %v1915
    %v1934 = vpack.c.b16 %v1918, %v1916
    %1951 = vmatprep.subr.bf16.mxu0 %v1920
    %1952 = vmatpush1.bf16.msra.mxu0 %v1919
    %1953 = vmatprep.subr.bf16.mxu0 %v1922
    %1954 = vmatpush1.bf16.msra.mxu0 %v1921
    %1955 = vmatprep.subr.bf16.mxu0 %v1924
    %1956 = vmatpush1.bf16.msra.mxu0 %v1923
    %1957 = vmatprep.subr.bf16.mxu0 %v1926
    %1958 = vmatpush1.bf16.msra.mxu0 %v1925
    %1959 = vmatprep.subr.bf16.mxu0 %v1928
    %1960 = vmatpush1.bf16.msra.mxu0 %v1927
    %1961 = vmatprep.subr.bf16.mxu0 %v1930
    %1962 = vmatpush1.bf16.msra.mxu0 %v1929
    %1963 = vmatprep.subr.bf16.mxu0 %v1932
    %1964 = vmatpush1.bf16.msra.mxu0 %v1931
    %1965 = vmatprep.subr.bf16.mxu0 %v1934
    %1966 = vmatpush1.bf16.msra.mxu0 %v1933
    %1967 = vmatprep.subr.bf16.mxu0 0
    %1968 = vmatpush1.bf16.msra.mxu0 0
    %1969 = vmatprep.subr.bf16.mxu0 0
    %1970 = vmatpush1.bf16.msra.mxu0 0
    %1971 = vmatprep.subr.bf16.mxu0 0
    %1972 = vmatpush1.bf16.msra.mxu0 0
    %1973 = vmatprep.subr.bf16.mxu0 0
    %1974 = vmatpush1.bf16.msra.mxu0 0
    %1975 = vmatprep.subr.bf16.mxu0 0
    %1976 = vmatpush1.bf16.msra.mxu0 0
    %1977 = vmatprep.subr.bf16.mxu0 0
    %1978 = vmatpush1.bf16.msra.mxu0 0
    %1979 = vmatprep.subr.bf16.mxu0 0
    %1980 = vmatpush1.bf16.msra.mxu0 0
    %1981 = vmatprep.subr.bf16.mxu0 0
    %1982 = vmatpush1.bf16.msra.mxu0 0
    %1983 = vmatprep.mubr.bf16.mxu0 0
    %1984 = vmatmul.mubr.bf16.gmra.mrb[0].mxu0 %v1869
    %v1985 = vpop.f32.mrb[0].mxu0
    %v1986 = vadd.f32 0.0, %v1985
    %v1987 = vpop.f32.mrb[0].mxu0
    %v1988 = vadd.f32 0.0, %v1987
    %v1989 = vpop.f32.mrb[0].mxu0
    %v1990 = vadd.f32 0.0, %v1989
    %v1991 = vpop.f32.mrb[0].mxu0
    %v1992 = vadd.f32 0.0, %v1991
    %1993 = vdwg.mxu0
    %v1994 = vadd.f32 %v1845, %v1986
    %v1995 = vadd.f32 %v1846, %v1988
    %v1996 = vadd.f32 %v1847, %v1990
    %v1997 = vadd.f32 %v1848, %v1992
    %v1998 = vmax.f32 %v1994, 0.0
    %v1999 = vmax.f32 %v1995, 0.0
    %v2000 = vmax.f32 %v1996, 0.0
    %v2001 = vmax.f32 %v1997, 0.0
    %v2002 = vmax.f32 %v1998, %v1999
    %v2003 = vmax.f32 %v2000, %v2001
    %v2004 = vld [vmem:[%s6] sm:$0x1]
    %v2006 = vlaneseq
    %v2007 = vshrl.u32 %v2006, 7
    %v2008 = vsub.s32 0, %v2007
    %v2009 = vrot.slane %v2004, %v2008
    %v2012 = vrot.slane %v2002, 2
    %v2014 = vmax.f32 %v2002, %v2012
    %v2015 = vpack.c.bf16 %v2014, %v2014
    %v2016 = vld [vmem:[%s5] sm:$0xf]
    %v2017 = vld [vmem:[%s5 + $0x4] sm:$0xf]
    %v2018 = vld [vmem:[%s5 + $0x8] sm:$0xf]
    %v2019 = vld [vmem:[%s5 + $0xc] sm:$0xf]
    %v2020 = vld [vmem:[%s5 + $0x10] sm:$0xf]
    %v2021 = vld [vmem:[%s5 + $0x14] sm:$0xf]
    %v2022 = vld [vmem:[%s5 + $0x18] sm:$0xf]
    %v2023 = vld [vmem:[%s5 + $0x1c] sm:$0xf]
    %v2024 = vld [vmem:[%s5 + $0x20] sm:$0xf]
    %v2025 = vld [vmem:[%s5 + $0x24] sm:$0xf]
    %v2026 = vld [vmem:[%s5 + $0x28] sm:$0xf]
    %v2027 = vld [vmem:[%s5 + $0x2c] sm:$0xf]
    %v2028 = vld [vmem:[%s5 + $0x30] sm:$0xf]
    %v2029 = vld [vmem:[%s5 + $0x34] sm:$0xf]
    %v2030 = vld [vmem:[%s5 + $0x38] sm:$0xf]
    %v2031 = vld [vmem:[%s5 + $0x3c] sm:$0xf]
    %v2048 = vunpack.c.l.b16 %v2016
    %v2049 = vunpack.c.l.b16 %v2017
    %v2050 = vunpack.c.l.b16 %v2018
    %v2051 = vunpack.c.l.b16 %v2019
    %v2052 = vunpack.c.l.b16 %v2020
    %v2053 = vunpack.c.l.b16 %v2021
    %v2054 = vunpack.c.l.b16 %v2022
    %v2055 = vunpack.c.l.b16 %v2023
    %v2056 = vunpack.c.l.b16 %v2024
    %v2057 = vunpack.c.l.b16 %v2025
    %v2058 = vunpack.c.l.b16 %v2026
    %v2059 = vunpack.c.l.b16 %v2027
    %v2060 = vunpack.c.l.b16 %v2028
    %v2061 = vunpack.c.l.b16 %v2029
    %v2062 = vunpack.c.l.b16 %v2030
    %v2063 = vunpack.c.l.b16 %v2031
    %v2064 = vpack.c.b16 %v2049, %v2048
    %v2065 = vpack.c.b16 %v2051, %v2050
    %v2066 = vpack.c.b16 %v2053, %v2052
    %v2067 = vpack.c.b16 %v2055, %v2054
    %v2068 = vpack.c.b16 %v2057, %v2056
    %v2069 = vpack.c.b16 %v2059, %v2058
    %v2070 = vpack.c.b16 %v2061, %v2060
    %v2071 = vpack.c.b16 %v2063, %v2062
    %2080 = vmatprep.subr.bf16.mxu0 0
    %2081 = vmatpush1.bf16.msra.mxu0 %v2064
    %2082 = vmatprep.subr.bf16.mxu0 0
    %2083 = vmatpush1.bf16.msra.mxu0 %v2065
    %2084 = vmatprep.subr.bf16.mxu0 0
    %2085 = vmatpush1.bf16.msra.mxu0 %v2066
    %2086 = vmatprep.subr.bf16.mxu0 0
    %2087 = vmatpush1.bf16.msra.mxu0 %v2067
    %2088 = vmatprep.subr.bf16.mxu0 0
    %2089 = vmatpush1.bf16.msra.mxu0 %v2068
    %2090 = vmatprep.subr.bf16.mxu0 0
    %2091 = vmatpush1.bf16.msra.mxu0 %v2069
    %2092 = vmatprep.subr.bf16.mxu0 0
    %2093 = vmatpush1.bf16.msra.mxu0 %v2070
    %2094 = vmatprep.subr.bf16.mxu0 0
    %2095 = vmatpush1.bf16.msra.mxu0 %v2071
    %2096 = vmatprep.subr.bf16.mxu0 0
    %2097 = vmatpush1.bf16.msra.mxu0 0
    %2098 = vmatprep.subr.bf16.mxu0 0
    %2099 = vmatpush1.bf16.msra.mxu0 0
    %2100 = vmatprep.subr.bf16.mxu0 0
    %2101 = vmatpush1.bf16.msra.mxu0 0
    %2102 = vmatprep.subr.bf16.mxu0 0
    %2103 = vmatpush1.bf16.msra.mxu0 0
    %2104 = vmatprep.subr.bf16.mxu0 0
    %2105 = vmatpush1.bf16.msra.mxu0 0
    %2106 = vmatprep.subr.bf16.mxu0 0
    %2107 = vmatpush1.bf16.msra.mxu0 0
    %2108 = vmatprep.subr.bf16.mxu0 0
    %2109 = vmatpush1.bf16.msra.mxu0 0
    %2110 = vmatprep.subr.bf16.mxu0 0
    %2111 = vmatpush1.bf16.msra.mxu0 0
    %2112 = vmatprep.mubr.bf16.mxu0 0
    %2113 = vmatmul.mubr.bf16.gmra.mrb[0].mxu0 %v2015
    %v2114 = vpop.f32.mrb[0].mxu0
    %v2115 = vadd.f32 0.0, %v2114
    %v2116 = vpop.f32.mrb[0].mxu0
    %v2117 = vpop.f32.mrb[0].mxu0
    %v2118 = vpop.f32.mrb[0].mxu0
    %2119 = vdwg.mxu0
    %v2120 = vadd.f32 %v2009, %v2115
    %s2121 = scalar_lea.vmem %s5, 64
    %v2122 = vld [vmem:[%s2121] sm:$0xf]
    %v2123 = vld [vmem:[%s2121 + $0x4] sm:$0xf]
    %v2124 = vld [vmem:[%s2121 + $0x8] sm:$0xf]
    %v2125 = vld [vmem:[%s2121 + $0xc] sm:$0xf]
    %v2126 = vld [vmem:[%s2121 + $0x10] sm:$0xf]
    %v2127 = vld [vmem:[%s2121 + $0x14] sm:$0xf]
    %v2128 = vld [vmem:[%s2121 + $0x18] sm:$0xf]
    %v2129 = vld [vmem:[%s2121 + $0x1c] sm:$0xf]
    %v2130 = vld [vmem:[%s2121 + $0x20] sm:$0xf]
    %v2131 = vld [vmem:[%s2121 + $0x24] sm:$0xf]
    %v2132 = vld [vmem:[%s2121 + $0x28] sm:$0xf]
    %v2133 = vld [vmem:[%s2121 + $0x2c] sm:$0xf]
    %v2134 = vld [vmem:[%s2121 + $0x30] sm:$0xf]
    %v2135 = vld [vmem:[%s2121 + $0x34] sm:$0xf]
    %v2136 = vld [vmem:[%s2121 + $0x38] sm:$0xf]
    %v2137 = vld [vmem:[%s2121 + $0x3c] sm:$0xf]
    %v2139 = vrot.slane %v2015, 2
    %v2157 = vunpack.c.l.b16 %v2122
    %v2158 = vunpack.c.l.b16 %v2123
    %v2159 = vunpack.c.l.b16 %v2124
    %v2160 = vunpack.c.l.b16 %v2125
    %v2161 = vunpack.c.l.b16 %v2126
    %v2162 = vunpack.c.l.b16 %v2127
    %v2163 = vunpack.c.l.b16 %v2128
    %v2164 = vunpack.c.l.b16 %v2129
    %v2165 = vunpack.c.l.b16 %v2130
    %v2166 = vunpack.c.l.b16 %v2131
    %v2167 = vunpack.c.l.b16 %v2132
    %v2168 = vunpack.c.l.b16 %v2133
    %v2169 = vunpack.c.l.b16 %v2134
    %v2170 = vunpack.c.l.b16 %v2135
    %v2171 = vunpack.c.l.b16 %v2136
    %v2172 = vunpack.c.l.b16 %v2137
    %v2173 = vpack.c.b16 %v2158, %v2157
    %v2174 = vpack.c.b16 %v2160, %v2159
    %v2175 = vpack.c.b16 %v2162, %v2161
    %v2176 = vpack.c.b16 %v2164, %v2163
    %v2177 = vpack.c.b16 %v2166, %v2165
    %v2178 = vpack.c.b16 %v2168, %v2167
    %v2179 = vpack.c.b16 %v2170, %v2169
    %v2180 = vpack.c.b16 %v2172, %v2171
    %2189 = vmatprep.subr.bf16.mxu0 0
    %2190 = vmatpush1.bf16.msra.mxu0 %v2173
    %2191 = vmatprep.subr.bf16.mxu0 0
    %2192 = vmatpush1.bf16.msra.mxu0 %v2174
    %2193 = vmatprep.subr.bf16.mxu0 0
    %2194 = vmatpush1.bf16.msra.mxu0 %v2175
    %2195 = vmatprep.subr.bf16.mxu0 0
    %2196 = vmatpush1.bf16.msra.mxu0 %v2176
    %2197 = vmatprep.subr.bf16.mxu0 0
    %2198 = vmatpush1.bf16.msra.mxu0 %v2177
    %2199 = vmatprep.subr.bf16.mxu0 0
    %2200 = vmatpush1.bf16.msra.mxu0 %v2178
    %2201 = vmatprep.subr.bf16.mxu0 0
    %2202 = vmatpush1.bf16.msra.mxu0 %v2179
    %2203 = vmatprep.subr.bf16.mxu0 0
    %2204 = vmatpush1.bf16.msra.mxu0 %v2180
    %2205 = vmatprep.subr.bf16.mxu0 0
    %2206 = vmatpush1.bf16.msra.mxu0 0
    %2207 = vmatprep.subr.bf16.mxu0 0
    %2208 = vmatpush1.bf16.msra.mxu0 0
    %2209 = vmatprep.subr.bf16.mxu0 0
    %2210 = vmatpush1.bf16.msra.mxu0 0
    %2211 = vmatprep.subr.bf16.mxu0 0
    %2212 = vmatpush1.bf16.msra.mxu0 0
    %2213 = vmatprep.subr.bf16.mxu0 0
    %2214 = vmatpush1.bf16.msra.mxu0 0
    %2215 = vmatprep.subr.bf16.mxu0 0
    %2216 = vmatpush1.bf16.msra.mxu0 0
    %2217 = vmatprep.subr.bf16.mxu0 0
    %2218 = vmatpush1.bf16.msra.mxu0 0
    %2219 = vmatprep.subr.bf16.mxu0 0
    %2220 = vmatpush1.bf16.msra.mxu0 0
    %2221 = vmatprep.mubr.bf16.mxu0 0
    %2222 = vmatmul.mubr.bf16.gmra.mrb[0].mxu0 %v2139
    %v2223 = vpop.f32.mrb[0].mxu0
    %v2224 = vadd.f32 0.0, %v2223
    %v2225 = vpop.f32.mrb[0].mxu0
    %v2226 = vpop.f32.mrb[0].mxu0
    %v2227 = vpop.f32.mrb[0].mxu0
    %2228 = vdwg.mxu0
    %v2229 = vadd.f32 %v2120, %v2224
    %v2231 = vrot.slane %v2003, 2
    %v2233 = vmax.f32 %v2003, %v2231
    %v2234 = vpack.c.bf16 %v2233, %v2233
    %s2235 = scalar_lea.vmem %s5, 128
    %v2236 = vld [vmem:[%s2235] sm:$0xf]
    %v2237 = vld [vmem:[%s2235 + $0x4] sm:$0xf]
    %v2238 = vld [vmem:[%s2235 + $0x8] sm:$0xf]
    %v2239 = vld [vmem:[%s2235 + $0xc] sm:$0xf]
    %v2240 = vld [vmem:[%s2235 + $0x10] sm:$0xf]
    %v2241 = vld [vmem:[%s2235 + $0x14] sm:$0xf]
    %v2242 = vld [vmem:[%s2235 + $0x18] sm:$0xf]
    %v2243 = vld [vmem:[%s2235 + $0x1c] sm:$0xf]
    %v2244 = vld [vmem:[%s2235 + $0x20] sm:$0xf]
    %v2245 = vld [vmem:[%s2235 + $0x24] sm:$0xf]
    %v2246 = vld [vmem:[%s2235 + $0x28] sm:$0xf]
    %v2247 = vld [vmem:[%s2235 + $0x2c] sm:$0xf]
    %v2248 = vld [vmem:[%s2235 + $0x30] sm:$0xf]
    %v2249 = vld [vmem:[%s2235 + $0x34] sm:$0xf]
    %v2250 = vld [vmem:[%s2235 + $0x38] sm:$0xf]
    %v2251 = vld [vmem:[%s2235 + $0x3c] sm:$0xf]
    %v2268 = vunpack.c.l.b16 %v2236
    %v2269 = vunpack.c.l.b16 %v2237
    %v2270 = vunpack.c.l.b16 %v2238
    %v2271 = vunpack.c.l.b16 %v2239
    %v2272 = vunpack.c.l.b16 %v2240
    %v2273 = vunpack.c.l.b16 %v2241
    %v2274 = vunpack.c.l.b16 %v2242
    %v2275 = vunpack.c.l.b16 %v2243
    %v2276 = vunpack.c.l.b16 %v2244
    %v2277 = vunpack.c.l.b16 %v2245
    %v2278 = vunpack.c.l.b16 %v2246
    %v2279 = vunpack.c.l.b16 %v2247
    %v2280 = vunpack.c.l.b16 %v2248
    %v2281 = vunpack.c.l.b16 %v2249
    %v2282 = vunpack.c.l.b16 %v2250
    %v2283 = vunpack.c.l.b16 %v2251
    %v2284 = vpack.c.b16 %v2269, %v2268
    %v2285 = vpack.c.b16 %v2271, %v2270
    %v2286 = vpack.c.b16 %v2273, %v2272
    %v2287 = vpack.c.b16 %v2275, %v2274
    %v2288 = vpack.c.b16 %v2277, %v2276
    %v2289 = vpack.c.b16 %v2279, %v2278
    %v2290 = vpack.c.b16 %v2281, %v2280
    %v2291 = vpack.c.b16 %v2283, %v2282
    %2300 = vmatprep.subr.bf16.mxu0 0
    %2301 = vmatpush1.bf16.msra.mxu0 %v2284
    %2302 = vmatprep.subr.bf16.mxu0 0
    %2303 = vmatpush1.bf16.msra.mxu0 %v2285
    %2304 = vmatprep.subr.bf16.mxu0 0
    %2305 = vmatpush1.bf16.msra.mxu0 %v2286
    %2306 = vmatprep.subr.bf16.mxu0 0
    %2307 = vmatpush1.bf16.msra.mxu0 %v2287
    %2308 = vmatprep.subr.bf16.mxu0 0
    %2309 = vmatpush1.bf16.msra.mxu0 %v2288
    %2310 = vmatprep.subr.bf16.mxu0 0
    %2311 = vmatpush1.bf16.msra.mxu0 %v2289
    %2312 = vmatprep.subr.bf16.mxu0 0
    %2313 = vmatpush1.bf16.msra.mxu0 %v2290
    %2314 = vmatprep.subr.bf16.mxu0 0
    %2315 = vmatpush1.bf16.msra.mxu0 %v2291
    %2316 = vmatprep.subr.bf16.mxu0 0
    %2317 = vmatpush1.bf16.msra.mxu0 0
    %2318 = vmatprep.subr.bf16.mxu0 0
    %2319 = vmatpush1.bf16.msra.mxu0 0
    %2320 = vmatprep.subr.bf16.mxu0 0
    %2321 = vmatpush1.bf16.msra.mxu0 0
    %2322 = vmatprep.subr.bf16.mxu0 0
    %2323 = vmatpush1.bf16.msra.mxu0 0
    %2324 = vmatprep.subr.bf16.mxu0 0
    %2325 = vmatpush1.bf16.msra.mxu0 0
    %2326 = vmatprep.subr.bf16.mxu0 0
    %2327 = vmatpush1.bf16.msra.mxu0 0
    %2328 = vmatprep.subr.bf16.mxu0 0
    %2329 = vmatpush1.bf16.msra.mxu0 0
    %2330 = vmatprep.subr.bf16.mxu0 0
    %2331 = vmatpush1.bf16.msra.mxu0 0
    %2332 = vmatprep.mubr.bf16.mxu0 0
    %2333 = vmatmul.mubr.bf16.gmra.mrb[0].mxu0 %v2234
    %v2334 = vpop.f32.mrb[0].mxu0
    %v2335 = vadd.f32 0.0, %v2334
    %v2336 = vpop.f32.mrb[0].mxu0
    %v2337 = vpop.f32.mrb[0].mxu0
    %v2338 = vpop.f32.mrb[0].mxu0
    %2339 = vdwg.mxu0
    %v2340 = vadd.f32 %v2229, %v2335
    %s2341 = scalar_lea.vmem %s5, 192
    %v2342 = vld [vmem:[%s2341] sm:$0xf]
    %v2343 = vld [vmem:[%s2341 + $0x4] sm:$0xf]
    %v2344 = vld [vmem:[%s2341 + $0x8] sm:$0xf]
    %v2345 = vld [vmem:[%s2341 + $0xc] sm:$0xf]
    %v2346 = vld [vmem:[%s2341 + $0x10] sm:$0xf]
    %v2347 = vld [vmem:[%s2341 + $0x14] sm:$0xf]
    %v2348 = vld [vmem:[%s2341 + $0x18] sm:$0xf]
    %v2349 = vld [vmem:[%s2341 + $0x1c] sm:$0xf]
    %v2350 = vld [vmem:[%s2341 + $0x20] sm:$0xf]
    %v2351 = vld [vmem:[%s2341 + $0x24] sm:$0xf]
    %v2352 = vld [vmem:[%s2341 + $0x28] sm:$0xf]
    %v2353 = vld [vmem:[%s2341 + $0x2c] sm:$0xf]
    %v2354 = vld [vmem:[%s2341 + $0x30] sm:$0xf]
    %v2355 = vld [vmem:[%s2341 + $0x34] sm:$0xf]
    %v2356 = vld [vmem:[%s2341 + $0x38] sm:$0xf]
    %v2357 = vld [vmem:[%s2341 + $0x3c] sm:$0xf]
    %v2359 = vrot.slane %v2234, 2
    %v2377 = vunpack.c.l.b16 %v2342
    %v2378 = vunpack.c.l.b16 %v2343
    %v2379 = vunpack.c.l.b16 %v2344
    %v2380 = vunpack.c.l.b16 %v2345
    %v2381 = vunpack.c.l.b16 %v2346
    %v2382 = vunpack.c.l.b16 %v2347
    %v2383 = vunpack.c.l.b16 %v2348
    %v2384 = vunpack.c.l.b16 %v2349
    %v2385 = vunpack.c.l.b16 %v2350
    %v2386 = vunpack.c.l.b16 %v2351
    %v2387 = vunpack.c.l.b16 %v2352
    %v2388 = vunpack.c.l.b16 %v2353
    %v2389 = vunpack.c.l.b16 %v2354
    %v2390 = vunpack.c.l.b16 %v2355
    %v2391 = vunpack.c.l.b16 %v2356
    %v2392 = vunpack.c.l.b16 %v2357
    %v2393 = vpack.c.b16 %v2378, %v2377
    %v2394 = vpack.c.b16 %v2380, %v2379
    %v2395 = vpack.c.b16 %v2382, %v2381
    %v2396 = vpack.c.b16 %v2384, %v2383
    %v2397 = vpack.c.b16 %v2386, %v2385
    %v2398 = vpack.c.b16 %v2388, %v2387
    %v2399 = vpack.c.b16 %v2390, %v2389
    %v2400 = vpack.c.b16 %v2392, %v2391
    %2409 = vmatprep.subr.bf16.mxu0 0
    %2410 = vmatpush1.bf16.msra.mxu0 %v2393
    %2411 = vmatprep.subr.bf16.mxu0 0
    %2412 = vmatpush1.bf16.msra.mxu0 %v2394
    %2413 = vmatprep.subr.bf16.mxu0 0
    %2414 = vmatpush1.bf16.msra.mxu0 %v2395
    %2415 = vmatprep.subr.bf16.mxu0 0
    %2416 = vmatpush1.bf16.msra.mxu0 %v2396
    %2417 = vmatprep.subr.bf16.mxu0 0
    %2418 = vmatpush1.bf16.msra.mxu0 %v2397
    %2419 = vmatprep.subr.bf16.mxu0 0
    %2420 = vmatpush1.bf16.msra.mxu0 %v2398
    %2421 = vmatprep.subr.bf16.mxu0 0
    %2422 = vmatpush1.bf16.msra.mxu0 %v2399
    %2423 = vmatprep.subr.bf16.mxu0 0
    %2424 = vmatpush1.bf16.msra.mxu0 %v2400
    %2425 = vmatprep.subr.bf16.mxu0 0
    %2426 = vmatpush1.bf16.msra.mxu0 0
    %2427 = vmatprep.subr.bf16.mxu0 0
    %2428 = vmatpush1.bf16.msra.mxu0 0
    %2429 = vmatprep.subr.bf16.mxu0 0
    %2430 = vmatpush1.bf16.msra.mxu0 0
    %2431 = vmatprep.subr.bf16.mxu0 0
    %2432 = vmatpush1.bf16.msra.mxu0 0
    %2433 = vmatprep.subr.bf16.mxu0 0
    %2434 = vmatpush1.bf16.msra.mxu0 0
    %2435 = vmatprep.subr.bf16.mxu0 0
    %2436 = vmatpush1.bf16.msra.mxu0 0
    %2437 = vmatprep.subr.bf16.mxu0 0
    %2438 = vmatpush1.bf16.msra.mxu0 0
    %2439 = vmatprep.subr.bf16.mxu0 0
    %2440 = vmatpush1.bf16.msra.mxu0 0
    %2441 = vmatprep.mubr.bf16.mxu0 0
    %2442 = vmatmul.mubr.bf16.gmra.mrb[0].mxu0 %v2359
    %v2443 = vpop.f32.mrb[0].mxu0
    %v2444 = vadd.f32 0.0, %v2443
    %v2445 = vpop.f32.mrb[0].mxu0
    %v2446 = vpop.f32.mrb[0].mxu0
    %v2447 = vpop.f32.mrb[0].mxu0
    %2448 = vdwg.mxu0
    %v2449 = vadd.f32 %v2340, %v2444
    %v2450 = vmax.f32 %v2449, 0.0
    %v2451 = vpack.c.bf16 %v2450, %v2450
    %v2452 = vld [vmem:[%s7] sm:$0xf]
    %v2453 = vld [vmem:[%s7 + $0x4] sm:$0xf]
    %v2454 = vld [vmem:[%s7 + $0x8] sm:$0xf]
    %v2455 = vld [vmem:[%s7 + $0xc] sm:$0xf]
    %v2456 = vld [vmem:[%s7 + $0x10] sm:$0xf]
    %v2457 = vld [vmem:[%s7 + $0x14] sm:$0xf]
    %v2458 = vld [vmem:[%s7 + $0x18] sm:$0xf]
    %v2459 = vld [vmem:[%s7 + $0x1c] sm:$0xf]
    %v2460 = vld [vmem:[%s7 + $0x20] sm:$0xf]
    %v2461 = vld [vmem:[%s7 + $0x24] sm:$0xf]
    %v2462 = vld [vmem:[%s7 + $0x28] sm:$0xf]
    %v2463 = vld [vmem:[%s7 + $0x2c] sm:$0xf]
    %v2464 = vld [vmem:[%s7 + $0x30] sm:$0xf]
    %v2465 = vld [vmem:[%s7 + $0x34] sm:$0xf]
    %v2466 = vld [vmem:[%s7 + $0x38] sm:$0xf]
    %v2467 = vld [vmem:[%s7 + $0x3c] sm:$0xf]
    %v2468 = vld [vmem:[%s8] sm:$0x1]
    %v2470 = vlaneseq
    %v2471 = vshrl.u32 %v2470, 7
    %v2472 = vsub.s32 0, %v2471
    %v2473 = vrot.slane %v2468, %v2472
    %v2491 = vunpack.c.l.b16 %v2452
    %v2492 = vunpack.c.l.b16 %v2453
    %v2493 = vunpack.c.l.b16 %v2454
    %v2494 = vunpack.c.l.b16 %v2455
    %v2495 = vunpack.c.l.b16 %v2456
    %v2496 = vunpack.c.l.b16 %v2457
    %v2497 = vunpack.c.l.b16 %v2458
    %v2498 = vunpack.c.l.b16 %v2459
    %v2499 = vunpack.c.l.b16 %v2460
    %v2500 = vunpack.c.l.b16 %v2461
    %v2501 = vunpack.c.l.b16 %v2462
    %v2502 = vunpack.c.l.b16 %v2463
    %v2503 = vunpack.c.l.b16 %v2464
    %v2504 = vunpack.c.l.b16 %v2465
    %v2505 = vunpack.c.l.b16 %v2466
    %v2506 = vunpack.c.l.b16 %v2467
    %v2507 = vpack.c.b16 %v2492, %v2491
    %v2508 = vpack.c.b16 %v2494, %v2493
    %v2509 = vpack.c.b16 %v2496, %v2495
    %v2510 = vpack.c.b16 %v2498, %v2497
    %v2511 = vpack.c.b16 %v2500, %v2499
    %v2512 = vpack.c.b16 %v2502, %v2501
    %v2513 = vpack.c.b16 %v2504, %v2503
    %v2514 = vpack.c.b16 %v2506, %v2505
    %2523 = vmatprep.subr.bf16.mxu0 0
    %2524 = vmatpush1.bf16.msra.mxu0 %v2507
    %2525 = vmatprep.subr.bf16.mxu0 0
    %2526 = vmatpush1.bf16.msra.mxu0 %v2508
    %2527 = vmatprep.subr.bf16.mxu0 0
    %2528 = vmatpush1.bf16.msra.mxu0 %v2509
    %2529 = vmatprep.subr.bf16.mxu0 0
    %2530 = vmatpush1.bf16.msra.mxu0 %v2510
    %2531 = vmatprep.subr.bf16.mxu0 0
    %2532 = vmatpush1.bf16.msra.mxu0 %v2511
    %2533 = vmatprep.subr.bf16.mxu0 0
    %2534 = vmatpush1.bf16.msra.mxu0 %v2512
    %2535 = vmatprep.subr.bf16.mxu0 0
    %2536 = vmatpush1.bf16.msra.mxu0 %v2513
    %2537 = vmatprep.subr.bf16.mxu0 0
    %2538 = vmatpush1.bf16.msra.mxu0 %v2514
    %2539 = vmatprep.subr.bf16.mxu0 0
    %2540 = vmatpush1.bf16.msra.mxu0 0
    %2541 = vmatprep.subr.bf16.mxu0 0
    %2542 = vmatpush1.bf16.msra.mxu0 0
    %2543 = vmatprep.subr.bf16.mxu0 0
    %2544 = vmatpush1.bf16.msra.mxu0 0
    %2545 = vmatprep.subr.bf16.mxu0 0
    %2546 = vmatpush1.bf16.msra.mxu0 0
    %2547 = vmatprep.subr.bf16.mxu0 0
    %2548 = vmatpush1.bf16.msra.mxu0 0
    %2549 = vmatprep.subr.bf16.mxu0 0
    %2550 = vmatpush1.bf16.msra.mxu0 0
    %2551 = vmatprep.subr.bf16.mxu0 0
    %2552 = vmatpush1.bf16.msra.mxu0 0
    %2553 = vmatprep.subr.bf16.mxu0 0
    %2554 = vmatpush1.bf16.msra.mxu0 0
    %2555 = vmatprep.mubr.bf16.mxu0 0
    %2556 = vmatmul.mubr.bf16.gmra.mrb[0].mxu0 %v2451
    %v2557 = vpop.f32.mrb[0].mxu0
    %v2558 = vadd.f32 %v2473, %v2557
    %v2559 = vpop.f32.mrb[0].mxu0
    %v2560 = vpop.f32.mrb[0].mxu0
    %v2561 = vpop.f32.mrb[0].mxu0
    %2562 = vdwg.mxu0
    %v2563 = vmax.f32 %v2558, 0.0
    %v2564 = vpack.c.bf16 %v2563, %v2563
    %v2565 = vld [vmem:[#allocation7] sm:$0xf]
    %v2566 = vld [vmem:[#allocation7 + $0x4] sm:$0xf]
    %v2567 = vld [vmem:[#allocation7 + $0x8] sm:$0xf]
    %v2568 = vld [vmem:[#allocation7 + $0xc] sm:$0xf]
    %v2569 = vld [vmem:[#allocation7 + $0x10] sm:$0xf]
    %v2570 = vld [vmem:[#allocation7 + $0x14] sm:$0xf]
    %v2571 = vld [vmem:[#allocation7 + $0x18] sm:$0xf]
    %v2572 = vld [vmem:[#allocation7 + $0x1c] sm:$0xf]
    %v2573 = vld [vmem:[#allocation7 + $0x20] sm:$0xf]
    %v2574 = vld [vmem:[#allocation7 + $0x24] sm:$0xf]
    %v2575 = vld [vmem:[#allocation7 + $0x28] sm:$0xf]
    %v2576 = vld [vmem:[#allocation7 + $0x2c] sm:$0xf]
    %v2577 = vld [vmem:[#allocation7 + $0x30] sm:$0xf]
    %v2578 = vld [vmem:[#allocation7 + $0x34] sm:$0xf]
    %v2579 = vld [vmem:[#allocation7 + $0x38] sm:$0xf]
    %v2580 = vld [vmem:[#allocation7 + $0x3c] sm:$0xf]
    %v2581 = vld [vmem:[%s10] sm:$0x1]
    %v2583 = vlaneseq
    %v2584 = vshrl.u32 %v2583, 7
    %v2585 = vsub.s32 0, %v2584
    %v2586 = vrot.slane %v2581, %v2585
    %v2604 = vunpack.c.l.b16 %v2565
    %v2605 = vunpack.c.l.b16 %v2566
    %v2606 = vunpack.c.l.b16 %v2567
    %v2607 = vunpack.c.l.b16 %v2568
    %v2608 = vunpack.c.l.b16 %v2569
    %v2609 = vunpack.c.l.b16 %v2570
    %v2610 = vunpack.c.l.b16 %v2571
    %v2611 = vunpack.c.l.b16 %v2572
    %v2612 = vunpack.c.l.b16 %v2573
    %v2613 = vunpack.c.l.b16 %v2574
    %v2614 = vunpack.c.l.b16 %v2575
    %v2615 = vunpack.c.l.b16 %v2576
    %v2616 = vunpack.c.l.b16 %v2577
    %v2617 = vunpack.c.l.b16 %v2578
    %v2618 = vunpack.c.l.b16 %v2579
    %v2619 = vunpack.c.l.b16 %v2580
    %v2620 = vpack.c.b16 %v2605, %v2604
    %v2621 = vpack.c.b16 %v2607, %v2606
    %v2622 = vpack.c.b16 %v2609, %v2608
    %v2623 = vpack.c.b16 %v2611, %v2610
    %v2624 = vpack.c.b16 %v2613, %v2612
    %v2625 = vpack.c.b16 %v2615, %v2614
    %v2626 = vpack.c.b16 %v2617, %v2616
    %v2627 = vpack.c.b16 %v2619, %v2618
    %2636 = vmatprep.subr.bf16.mxu0 0
    %2637 = vmatpush1.bf16.msra.mxu0 %v2620
    %2638 = vmatprep.subr.bf16.mxu0 0
    %2639 = vmatpush1.bf16.msra.mxu0 %v2621
    %2640 = vmatprep.subr.bf16.mxu0 0
    %2641 = vmatpush1.bf16.msra.mxu0 %v2622
    %2642 = vmatprep.subr.bf16.mxu0 0
    %2643 = vmatpush1.bf16.msra.mxu0 %v2623
    %2644 = vmatprep.subr.bf16.mxu0 0
    %2645 = vmatpush1.bf16.msra.mxu0 %v2624
    %2646 = vmatprep.subr.bf16.mxu0 0
    %2647 = vmatpush1.bf16.msra.mxu0 %v2625
    %2648 = vmatprep.subr.bf16.mxu0 0
    %2649 = vmatpush1.bf16.msra.mxu0 %v2626
    %2650 = vmatprep.subr.bf16.mxu0 0
    %2651 = vmatpush1.bf16.msra.mxu0 %v2627
    %2652 = vmatprep.subr.bf16.mxu0 0
    %2653 = vmatpush1.bf16.msra.mxu0 0
    %2654 = vmatprep.subr.bf16.mxu0 0
    %2655 = vmatpush1.bf16.msra.mxu0 0
    %2656 = vmatprep.subr.bf16.mxu0 0
    %2657 = vmatpush1.bf16.msra.mxu0 0
    %2658 = vmatprep.subr.bf16.mxu0 0
    %2659 = vmatpush1.bf16.msra.mxu0 0
    %2660 = vmatprep.subr.bf16.mxu0 0
    %2661 = vmatpush1.bf16.msra.mxu0 0
    %2662 = vmatprep.subr.bf16.mxu0 0
    %2663 = vmatpush1.bf16.msra.mxu0 0
    %2664 = vmatprep.subr.bf16.mxu0 0
    %2665 = vmatpush1.bf16.msra.mxu0 0
    %2666 = vmatprep.subr.bf16.mxu0 0
    %2667 = vmatpush1.bf16.msra.mxu0 0
    %2668 = vmatprep.mubr.bf16.mxu0 0
    %2669 = vmatmul.mubr.bf16.gmra.mrb[0].mxu0 %v2564
    %v2670 = vpop.f32.mrb[0].mxu0
    %v2671 = vadd.f32 %v2586, %v2670
    %v2672 = vpop.f32.mrb[0].mxu0
    %v2673 = vpop.f32.mrb[0].mxu0
    %v2674 = vpop.f32.mrb[0].mxu0
    %2675 = vdwg.mxu0
    %2676 = vst [vmem:[#allocation8] sm:$0x3] %v2671
    // Predicated region
    $region58: #{garment_classifier_forward.1} parent=1 // pred_check
      _
    $region59: #{garment_classifier_forward.1} parent=1 // pred_check_branch
      %2678 = sbr.rel (0) target = $region61
    $region60: #{garment_classifier_forward.1} parent=1 // pred_region
      %s2680 = ssub.s32 32, 32
      %2681 = vsyncadd [#allocation4], %s2680
      %s2683 = sshll.u32 [#allocation8], 4
      %s2684 = int_to_ptr.vmem [resolvable:$true] %s2683
      %2686 = dma.vmem_to_hbm [thread:$0]  %s2684, 32, %s11, [#allocation4]
    $region61: #{garment_classifier_forward.1} parent=1 // pred_fallthru
      _
    // Predicated region
    $region62: #{garment_classifier_forward.1} parent=1 // pred_check
      _
    $region63: #{garment_classifier_forward.1} parent=1 // pred_check_branch
      %2688 = sbr.rel (0) target = $region65
    $region64: #{garment_classifier_forward.1} parent=1 // pred_region
      %2689 = dma.done [#allocation4], 32
    $region65: #{garment_classifier_forward.1} parent=1 // pred_fallthru
      _
    %2690 = vsyncpa [#allocation3], 1
    %2691 = vsyncpa [#allocation6], 1
    %2692 = vsyncpa [#allocation4], 1

</llo_original>
